<compile_context>
chip_gen: v7x
topology: tpu7x:2x2x1
jax: 0.10.0
libtpu: 0.0.40
codegen_flags: <defaults>
</compile_context>

<pallas_src>
import jax
import jax.numpy as jnp
from jax.experimental import pallas as pl
from jax.experimental.pallas import tpu as pltpu


def _round_up(x, m):
    return (x + m - 1) // m * m


def convblock_dn_kernel(x_ref, w_ref, b_ref, o_ref):
    """One batch element per grid step.

    x_ref: (H+2, W+2, Cin)  spatially pre-padded NHWC tile (VMEM)
    w_ref: (9*Cin, Cp)      packed conv weights, K index = (kw*3 + kh)*Cin + ci
    b_ref: (1, Cp)          bias, zero-padded to Cp
    o_ref: (H*W, Cp)        lane-dense output tile (Cp % 128 == 0)
    """
    HP, WP, Cin = x_ref.shape
    H, W = HP - 2, WP - 2

    # Build the (H*W, 9*Cin) im2col patch matrix.  kw (sublane offset) is the outer
    # loop so only 3 sublane-shifted slices are materialized; the kh slices and the
    # (H, W, Cin) -> (H*W, Cin) leading-dim collapses are free.
    taps = []
    for kw in range(3):
        xs = x_ref[:, kw:kw + W, :]                    # (H+2, W, Cin)
        for kh in range(3):
            taps.append(xs[kh:kh + H].reshape(H * W, Cin))
    patches = jnp.concatenate(taps, axis=1)            # (H*W, 9*Cin)

    # Single fused MXU contraction with f32 accumulation.
    acc = jnp.dot(patches, w_ref[...], preferred_element_type=jnp.float32)
    acc = acc + b_ref[...].astype(jnp.float32)         # broadcast (1, Cp)

    # LeakyReLU(negative_slope=0.2) in f32, then cast to output dtype.
    out = jnp.where(acc >= 0, acc, 0.2 * acc)
    o_ref[...] = out.astype(o_ref.dtype)


def conv_block_dn_nhwc(x_nhwc, w_hwio, bias):
    """ConvBlock_DN forward, channels-last.

    x_nhwc: (B, H, W, Cin), w_hwio: (3, 3, Cin, Cout), bias: (Cout,)
    returns (B, H, W, Cout)
    """
    B, H, W, Cin = x_nhwc.shape
    KH, KW, _, Cout = w_hwio.shape
    assert (KH, KW) == (3, 3), "ConvBlock_DN uses a 3x3 kernel"
    Cp = _round_up(Cout, 128)

    # +1 spatial halo for padding=1 (single cheap pass; no layout transposes).
    x_pad = jnp.pad(x_nhwc, ((0, 0), (1, 1), (1, 1), (0, 0)))

    # Pack weights to (9*Cin, Cp); K ordered (kw, kh, ci) to match the kernel's tap
    # order, Cout zero-padded to Cp so the matmul N / output store are lane-dense.
    w2 = jnp.transpose(w_hwio, (1, 0, 2, 3)).reshape(KH * KW * Cin, Cout)
    w2 = jnp.pad(w2, ((0, 0), (0, Cp - Cout))).astype(x_nhwc.dtype)
    b2 = jnp.pad(bias, (0, Cp - Cout)).reshape(1, Cp).astype(jnp.float32)

    out = pl.pallas_call(
        convblock_dn_kernel,
        out_shape=jax.ShapeDtypeStruct((B, H * W, Cp), x_nhwc.dtype),
        grid_spec=pltpu.PrefetchScalarGridSpec(
            num_scalar_prefetch=0,
            grid=(B,),
            in_specs=[
                pl.BlockSpec((None, H + 2, W + 2, Cin), lambda b: (b, 0, 0, 0)),
                pl.BlockSpec((KH * KW * Cin, Cp), lambda b: (0, 0)),
                pl.BlockSpec((1, Cp), lambda b: (0, 0)),
            ],
            out_specs=pl.BlockSpec((None, H * W, Cp), lambda b: (b, 0, 0)),
        ),
        compiler_params=pltpu.CompilerParams(
            dimension_semantics=("parallel",),          # B steps feed both TCs on v7x
            vmem_limit_bytes=64 * 1024 * 1024,          # raise scoped VMEM (v6e default 32MiB)
        ),
    )(x_pad, w2, b2)

    if Cp != Cout:
        out = out[:, :, :Cout]                          # drop lane padding
    return out.reshape(B, H, W, Cout)


def conv_block_dn(x_nchw, weight_oihw, bias):
    """PyTorch-layout convenience wrapper (NCHW in/out, OIHW weights)."""
    x_nhwc = jnp.transpose(x_nchw, (0, 2, 3, 1))
    w_hwio = jnp.transpose(weight_oihw, (2, 3, 1, 0))
    out_nhwc = conv_block_dn_nhwc(x_nhwc, w_hwio, bias)
    return jnp.transpose(out_nhwc, (0, 3, 1, 2))


def reference(x_nchw, weight_oihw, bias):
    out = jax.lax.conv_general_dilated(
        x_nchw, weight_oihw,
        window_strides=(1, 1), padding=((1, 1), (1, 1)),
        dimension_numbers=("NCHW", "OIHW", "NCHW"))
    out = out + bias.reshape(1, -1, 1, 1)
    return jnp.where(out >= 0, out, 0.2 * out)


if __name__ == "__main__":
    B, Cin, H, W = 2, 4, 16, 16
    Cout = 8

    key = jax.random.PRNGKey(0)
    kx, kw_, kb = jax.random.split(key, 3)
    # PyTorch-layout test data (NCHW / OIHW); converted once below as harness prep
    # for the NHWC-native kernel path.
    x_nchw = jax.random.normal(kx, (B, Cin, H, W), dtype=jnp.float32)
    weight = 0.1 * jax.random.normal(kw_, (Cout, Cin, 3, 3), dtype=jnp.float32)
    bias = 0.1 * jax.random.normal(kb, (Cout,), dtype=jnp.float32)

    x_nhwc = jnp.transpose(x_nchw, (0, 2, 3, 1))
    w_hwio = jnp.transpose(weight, (2, 3, 1, 0))

    out_nhwc = conv_block_dn_nhwc(x_nhwc, w_hwio, bias)
    out_nhwc = jax.block_until_ready(out_nhwc)

    ref_nchw = reference(x_nchw, weight, bias)
    ref_nhwc = jnp.transpose(ref_nchw, (0, 2, 3, 1))

    assert out_nhwc.shape == (B, H, W, Cout)
    assert jnp.allclose(out_nhwc, ref_nhwc, atol=1e-4, rtol=1e-4), "NHWC path mismatch"

    # Also sanity-check the PyTorch-layout convenience wrapper.
    out_nchw = jax.block_until_ready(conv_block_dn(x_nchw, weight, bias))
    assert out_nchw.shape == (B, Cout, H, W)
    assert jnp.allclose(out_nchw, ref_nchw, atol=1e-4, rtol=1e-4), "NCHW wrapper mismatch"

    print("KERNEL_OK")
</pallas_src>

<mosaic_0001>
module attributes {stable_mosaic.version = 11 : i64} {
  func.func @convblock_dn_kernel(%arg0: i32, %arg1: memref<1x18x18x4xf32, #tpu.memory_space<vmem>>, %arg2: memref<36x128xf32, #tpu.memory_space<vmem>>, %arg3: memref<1x128xf32, #tpu.memory_space<vmem>>, %arg4: memref<1x256x128xf32, #tpu.memory_space<vmem>>) attributes {dimension_semantics = [#tpu.dimension_semantics<parallel>], iteration_bounds = array<i64: 2>, scalar_prefetch = 0 : i64, scratch_operands = 0 : i64, tpu.core_type = #tpu.core_type<tc>, window_params = [{transform_indices = @transform_0, window_bounds = array<i64: 1, 18, 18, 4>}, {pipeline_mode = #tpu.pipeline_mode<synchronous>, transform_indices = @transform_1, window_bounds = array<i64: 36, 128>}, {pipeline_mode = #tpu.pipeline_mode<synchronous>, transform_indices = @transform_2, window_bounds = array<i64: 1, 128>}, {transform_indices = @transform_3, window_bounds = array<i64: 1, 256, 128>}]} {
    %c0 = arith.constant 0 : index
    %c0_0 = arith.constant 0 : index
    %c0_1 = arith.constant 0 : index
    %c0_2 = arith.constant 0 : index
    %0 = vector.load %arg1[%c0, %c0_0, %c0_1, %c0_2] : memref<1x18x18x4xf32, #tpu.memory_space<vmem>>, vector<1x18x16x4xf32>
    %1 = vector.shape_cast %0 : vector<1x18x16x4xf32> to vector<18x16x4xf32>
    %2 = vector.extract_strided_slice %1 {offsets = [0, 0, 0], sizes = [16, 16, 4], strides = [1, 1, 1]} : vector<18x16x4xf32> to vector<16x16x4xf32>
    %3 = vector.shape_cast %2 : vector<16x16x4xf32> to vector<256x4xf32>
    %4 = vector.extract_strided_slice %1 {offsets = [1, 0, 0], sizes = [16, 16, 4], strides = [1, 1, 1]} : vector<18x16x4xf32> to vector<16x16x4xf32>
    %5 = vector.shape_cast %4 : vector<16x16x4xf32> to vector<256x4xf32>
    %6 = vector.extract_strided_slice %1 {offsets = [2, 0, 0], sizes = [16, 16, 4], strides = [1, 1, 1]} : vector<18x16x4xf32> to vector<16x16x4xf32>
    %7 = vector.shape_cast %6 : vector<16x16x4xf32> to vector<256x4xf32>
    %c0_3 = arith.constant 0 : index
    %c0_4 = arith.constant 0 : index
    %c1 = arith.constant 1 : index
    %c0_5 = arith.constant 0 : index
    %8 = vector.load %arg1[%c0_3, %c0_4, %c1, %c0_5] : memref<1x18x18x4xf32, #tpu.memory_space<vmem>>, vector<1x18x16x4xf32>
    %9 = vector.shape_cast %8 : vector<1x18x16x4xf32> to vector<18x16x4xf32>
    %10 = vector.extract_strided_slice %9 {offsets = [0, 0, 0], sizes = [16, 16, 4], strides = [1, 1, 1]} : vector<18x16x4xf32> to vector<16x16x4xf32>
    %11 = vector.shape_cast %10 : vector<16x16x4xf32> to vector<256x4xf32>
    %12 = vector.extract_strided_slice %9 {offsets = [1, 0, 0], sizes = [16, 16, 4], strides = [1, 1, 1]} : vector<18x16x4xf32> to vector<16x16x4xf32>
    %13 = vector.shape_cast %12 : vector<16x16x4xf32> to vector<256x4xf32>
    %14 = vector.extract_strided_slice %9 {offsets = [2, 0, 0], sizes = [16, 16, 4], strides = [1, 1, 1]} : vector<18x16x4xf32> to vector<16x16x4xf32>
    %15 = vector.shape_cast %14 : vector<16x16x4xf32> to vector<256x4xf32>
    %c0_6 = arith.constant 0 : index
    %c0_7 = arith.constant 0 : index
    %c2 = arith.constant 2 : index
    %c0_8 = arith.constant 0 : index
    %16 = vector.load %arg1[%c0_6, %c0_7, %c2, %c0_8] : memref<1x18x18x4xf32, #tpu.memory_space<vmem>>, vector<1x18x16x4xf32>
    %17 = vector.shape_cast %16 : vector<1x18x16x4xf32> to vector<18x16x4xf32>
    %18 = vector.extract_strided_slice %17 {offsets = [0, 0, 0], sizes = [16, 16, 4], strides = [1, 1, 1]} : vector<18x16x4xf32> to vector<16x16x4xf32>
    %19 = vector.shape_cast %18 : vector<16x16x4xf32> to vector<256x4xf32>
    %20 = vector.extract_strided_slice %17 {offsets = [1, 0, 0], sizes = [16, 16, 4], strides = [1, 1, 1]} : vector<18x16x4xf32> to vector<16x16x4xf32>
    %21 = vector.shape_cast %20 : vector<16x16x4xf32> to vector<256x4xf32>
    %22 = vector.extract_strided_slice %17 {offsets = [2, 0, 0], sizes = [16, 16, 4], strides = [1, 1, 1]} : vector<18x16x4xf32> to vector<16x16x4xf32>
    %23 = vector.shape_cast %22 : vector<16x16x4xf32> to vector<256x4xf32>
    %24 = tpu.concatenate %3, %5, %7, %11, %13, %15, %19, %21, %23 in 1 : vector<256x4xf32>, vector<256x4xf32>, vector<256x4xf32>, vector<256x4xf32>, vector<256x4xf32>, vector<256x4xf32>, vector<256x4xf32>, vector<256x4xf32>, vector<256x4xf32> -> vector<256x36xf32>
    %c0_9 = arith.constant 0 : index
    %c0_10 = arith.constant 0 : index
    %25 = vector.load %arg2[%c0_9, %c0_10] : memref<36x128xf32, #tpu.memory_space<vmem>>, vector<36x128xf32>
    %cst = arith.constant dense<0.000000e+00> : vector<256x128xf32>
    %26 = tpu.matmul %24, %25, %cst {dimension_numbers = #tpu.dot_dimension_numbers<[1], [0], [0], [1], [0, 0, 1, 1], [], []>} : vector<256x36xf32>, vector<36x128xf32>, vector<256x128xf32> -> vector<256x128xf32>
    %c0_11 = arith.constant 0 : index
    %c0_12 = arith.constant 0 : index
    %27 = vector.load %arg3[%c0_11, %c0_12] : memref<1x128xf32, #tpu.memory_space<vmem>>, vector<1x128xf32>
    %28 = vector.broadcast %27 : vector<1x128xf32> to vector<256x128xf32>
    %29 = arith.addf %26, %28 : vector<256x128xf32>
    %cst_13 = arith.constant 0.000000e+00 : f32
    %30 = vector.broadcast %cst_13 : f32 to vector<256x128xf32>
    %31 = arith.cmpf oge, %29, %30 : vector<256x128xf32>
    %cst_14 = arith.constant 2.000000e-01 : f32
    %32 = vector.broadcast %cst_14 : f32 to vector<256x128xf32>
    %33 = arith.mulf %32, %29 : vector<256x128xf32>
    %34 = arith.select %31, %29, %33 : vector<256x128xi1>, vector<256x128xf32>
    %c0_15 = arith.constant 0 : index
    %c0_16 = arith.constant 0 : index
    %c0_17 = arith.constant 0 : index
    %35 = vector.load %arg4[%c0_15, %c0_16, %c0_17] : memref<1x256x128xf32, #tpu.memory_space<vmem>>, vector<1x256x128xf32>
    %36 = vector.shape_cast %35 : vector<1x256x128xf32> to vector<256x128xf32>
    %37 = vector.shape_cast %34 : vector<256x128xf32> to vector<1x256x128xf32>
    tpu.vector_store %arg4[%c0_15, %c0_16, %c0_17], %37 {strides = array<i32>} : memref<1x256x128xf32, #tpu.memory_space<vmem>>, vector<1x256x128xf32>,
    return
  }
  func.func @transform_0(%arg0: i32) -> (i32, i32, i32, i32) {
    %c0_i32 = arith.constant 0 : i32
    %c0_i32_0 = arith.constant 0 : i32
    %c0_i32_1 = arith.constant 0 : i32
    %c0_i32_2 = arith.constant 0 : i32
    return %arg0, %c0_i32, %c0_i32_0, %c0_i32_1 : i32, i32, i32, i32
  }
  func.func @transform_1(%arg0: i32) -> (i32, i32) {
    %c0_i32 = arith.constant 0 : i32
    %c0_i32_0 = arith.constant 0 : i32
    %c0_i32_1 = arith.constant 0 : i32
    return %c0_i32, %c0_i32_0 : i32, i32
  }
  func.func @transform_2(%arg0: i32) -> (i32, i32) {
    %c0_i32 = arith.constant 0 : i32
    %c0_i32_0 = arith.constant 0 : i32
    %c0_i32_1 = arith.constant 0 : i32
    return %c0_i32, %c0_i32_0 : i32, i32
  }
  func.func @transform_3(%arg0: i32) -> (i32, i32, i32) {
    %c0_i32 = arith.constant 0 : i32
    %c0_i32_0 = arith.constant 0 : i32
    %c0_i32_1 = arith.constant 0 : i32
    return %arg0, %c0_i32, %c0_i32_0 : i32, i32, i32
  }
}

</mosaic_0001>

<llo_original>
// kernel: tpu_custom_call.1
$region0: #{tpu_custom_call.1}
  #allocation0 [shape = 'u32[]', space=smem, size = 0x4, offset = 0x4, fixed_abs, tag = 'smem constant byte address 0x4 - core index']
  #allocation1 [shape = 'u32[144,128]{1,0:T(1,128)}', space=vmem, size = 0x12000, scoped, tag = 'internal scratch']
  %s0 = inlined_call_operand.hbm [shape: f32[2,18,18,4], index: 0, kind: input, shape index: {}]
  %s1 = inlined_call_operand.hbm [shape: f32[36,128], index: 1, kind: input, shape index: {}]
  %s2 = inlined_call_operand.hbm [shape: f32[1,128], index: 2, kind: input, shape index: {}]
  %s3 = inlined_call_operand.hbm [shape: f32[2,256,128], index: 3, kind: output, shape index: {}]
  %s4 = sld [smem:[#allocation0]]
  $region57: #{tpu_custom_call.1} parent=0
    _
  %s6 = ssub.s32 1, %s4
  %s7 = scalar_select 0, %s6, %s4
  $region1: #{tpu_custom_call.1} parent=0
    #allocation2 [shape = 'u8[442368]{0}', space=vmem, size = 0x6c000, scoped, tag = 'input window, operand 0']
    #allocation3 [shape = 's32[2]{0}', space=sflag, size = 0x8, scoped, tag = 'scoped memory for tpu_custom_call.1']
    #allocation4 [shape = 's32[2]{0}', space=sflag, size = 0x8, scoped, tag = 'scoped memory for tpu_custom_call.1']
    #allocation5 [shape = 'u8[20480]{0}', space=vmem, size = 0x5000, scoped, tag = 'input window, operand 1, single buffered']
    #allocation6 [shape = 's32[1]{0}', space=sflag, size = 0x4, scoped, tag = 'scoped memory for tpu_custom_call.1']
    #allocation7 [shape = 'u8[512]{0}', space=vmem, size = 0x400, scoped, tag = 'input window, operand 2, single buffered']
    #allocation8 [shape = 'u8[262144]{0}', space=vmem, size = 0x40000, scoped, tag = 'output window, operand 0']
    %8 = vsyncpa [#allocation3], 0
    %s9 = scalar_lea.sflag [#allocation3], 1
    %10 = vsyncpa %s9, 0
    %11 = vsyncpa [#allocation6], 0
    %12 = vsyncpa [#allocation4], 0
    %s13 = scalar_lea.sflag [#allocation4], 1
    %14 = vsyncpa %s13, 0
    loop: start=0, step=1, limit=4
    $region2: #{tpu_custom_call.1} parent=1 // loop_pre_header
      _
    $region3: #{tpu_custom_call.1} parent=1 // loop_header
      %s16 = sphi 0, %s20
      %p17 = scmp.ge.s32.totalorder %s16, 4
      %s26 = sphi 0, %s28
      %s29 = sphi 0, %s26
      %s30 = sphi 0, %s29
      %s46 = sphi 0, %s30
      %s50 = sphi 0, %s50
      %s52 = sphi 0, %s50
      %s53 = sphi 0, %s52
      %s67 = sphi 0, %s53
      %s71 = sphi 0, %s71
      %s73 = sphi 0, %s71
      %s74 = sphi 0, %s73
      %s88 = sphi 0, %s74
      %s94 = sphi 0, %s96
      %s97 = sphi 0, %s94
      %s98 = sphi 0, %s97
      %s114 = sphi 0, %s98
    $region4: #{tpu_custom_call.1} parent=1 // loop_header_branch
      %19 = sbr.rel (%p17) target = $region8
    $region5: #{tpu_custom_call.1} parent=1 // loop_body
      %s21 = ssub.s32 %s16, 1
      %s22 = ssub.s32 %s16, 2
      %s23 = sadd.s32 %s16, 1
      %s24 = ssub.s32 %s16, %s23
      %p25 = scmp.eq.s32.totalorder %s24, 0
      %s27 = sadd.s32 %s26, 1
      %s28 = scalar_select %p25, %s26, %s27
      %p31 = pneg %p25
      %p32 = scmp.eq.s32.totalorder %s16, 1
      %p33 = por %p31, %p32
      %p34 = scmp.ne.s32.totalorder %s26, %s29
      %p35 = scmp.eq.s32.totalorder %s16, 0
      %p36 = por %p34, %p35
      %p37 = scmp.ne.s32.totalorder %s26, %s29
      %p38 = scmp.eq.s32.totalorder %s21, 1
      %p39 = por %p37, %p38
      %p40 = scmp.ne.s32.totalorder %s29, %s30
      %p41 = scmp.eq.s32.totalorder %s21, 0
      %p42 = por %p40, %p41
      %p43 = scmp.ne.s32.totalorder %s29, %s30
      %p44 = scmp.eq.s32.totalorder %s22, 1
      %p45 = por %p43, %p44
      %p47 = scmp.ne.s32.totalorder %s30, %s46
      %p48 = scmp.eq.s32.totalorder %s22, 0
      %p49 = por %p47, %p48
      %s51 = sadd.s32 %s50, 1
      %p54 = scmp.eq.s32.totalorder %s16, 1
      %p55 = scmp.ne.s32.totalorder %s50, %s52
      %p56 = scmp.eq.s32.totalorder %s16, 0
      %p57 = por %p55, %p56
      %p58 = scmp.ne.s32.totalorder %s50, %s52
      %p59 = scmp.eq.s32.totalorder %s21, 1
      %p60 = por %p58, %p59
      %p61 = scmp.ne.s32.totalorder %s52, %s53
      %p62 = scmp.eq.s32.totalorder %s21, 0
      %p63 = por %p61, %p62
      %p64 = scmp.ne.s32.totalorder %s52, %s53
      %p65 = scmp.eq.s32.totalorder %s22, 1
      %p66 = por %p64, %p65
      %p68 = scmp.ne.s32.totalorder %s53, %s67
      %p69 = scmp.eq.s32.totalorder %s22, 0
      %p70 = por %p68, %p69
      %s72 = sadd.s32 %s71, 1
      %p75 = scmp.eq.s32.totalorder %s16, 1
      %p76 = scmp.ne.s32.totalorder %s71, %s73
      %p77 = scmp.eq.s32.totalorder %s16, 0
      %p78 = por %p76, %p77
      %p79 = scmp.ne.s32.totalorder %s71, %s73
      %p80 = scmp.eq.s32.totalorder %s21, 1
      %p81 = por %p79, %p80
      %p82 = scmp.ne.s32.totalorder %s73, %s74
      %p83 = scmp.eq.s32.totalorder %s21, 0
      %p84 = por %p82, %p83
      %p85 = scmp.ne.s32.totalorder %s73, %s74
      %p86 = scmp.eq.s32.totalorder %s22, 1
      %p87 = por %p85, %p86
      %p89 = scmp.ne.s32.totalorder %s74, %s88
      %p90 = scmp.eq.s32.totalorder %s22, 0
      %p91 = por %p89, %p90
      %s92 = ssub.s32 %s16, %s23
      %p93 = scmp.eq.s32.totalorder %s92, 0
      %s95 = sadd.s32 %s94, 1
      %s96 = scalar_select %p93, %s94, %s95
      %p99 = pneg %p93
      %p100 = scmp.eq.s32.totalorder %s16, 1
      %p101 = por %p99, %p100
      %p102 = scmp.ne.s32.totalorder %s94, %s97
      %p103 = scmp.eq.s32.totalorder %s16, 0
      %p104 = por %p102, %p103
      %p105 = scmp.ne.s32.totalorder %s94, %s97
      %p106 = scmp.eq.s32.totalorder %s21, 1
      %p107 = por %p105, %p106
      %p108 = scmp.ne.s32.totalorder %s97, %s98
      %p109 = scmp.eq.s32.totalorder %s21, 0
      %p110 = por %p108, %p109
      %p111 = scmp.ne.s32.totalorder %s97, %s98
      %p112 = scmp.eq.s32.totalorder %s22, 1
      %p113 = por %p111, %p112
      %p115 = scmp.ne.s32.totalorder %s98, %s114
      %p116 = scmp.eq.s32.totalorder %s22, 0
      %p117 = por %p115, %p116
      %p118 = scmp.le.s32.totalorder 1, %s16
      %p119 = scmp.lt.s32.totalorder %s16, 3
      %p120 = pnand %p118, %p119
      %p121 = pneg %p120
      // Predicated region
      $region9: #{tpu_custom_call.1} parent=5 // pred_check
        _
      $region10: #{tpu_custom_call.1} parent=5 // pred_check_branch
        %123 = sbr.rel (%p120) target = $region12
      $region11: #{tpu_custom_call.1} parent=5 // pred_region
        %s124 = ssub.s32 %s16, 1
        // Predicated region
        $region13: #{tpu_custom_call.1} parent=11 // pred_check
          %p125 = pneg %p63
        $region14: #{tpu_custom_call.1} parent=11 // pred_check_branch
          %127 = sbr.rel (%p125) target = $region16
        $region15: #{tpu_custom_call.1} parent=11 // pred_region
          %s129 = ssub.s32 640, 640
          %130 = vsyncadd [#allocation6], %s129
          %s131 = sshll.u32 [#allocation5], 4
          %s132 = int_to_ptr.vmem [resolvable:$true] %s131
          %137 = dma.hbm_to_vmem [thread:$0]  %s1, 640, %s132, [#allocation6], 128, 128, 8
        $region16: #{tpu_custom_call.1} parent=11 // pred_fallthru
          _
        // Predicated region
        $region17: #{tpu_custom_call.1} parent=11 // pred_check
          %p138 = pneg %p84
        $region18: #{tpu_custom_call.1} parent=11 // pred_check_branch
          %140 = sbr.rel (%p138) target = $region20
        $region19: #{tpu_custom_call.1} parent=11 // pred_region
          %s142 = ssub.s32 16, 16
          %143 = vsyncadd [#allocation6], %s142
          %s145 = sshll.u32 [#allocation7], 4
          %s146 = int_to_ptr.vmem [resolvable:$true] %s145
          %148 = dma.hbm_to_vmem [thread:$0]  %s2, 16, %s146, [#allocation6]
        $region20: #{tpu_custom_call.1} parent=11 // pred_fallthru
          _
      $region12: #{tpu_custom_call.1} parent=5 // pred_fallthru
        _
      %p149 = scmp.lt.s32.totalorder %s16, 2
      // Predicated region
      $region21: #{tpu_custom_call.1} parent=5 // pred_check
        %p150 = pneg %p149
      $region22: #{tpu_custom_call.1} parent=5 // pred_check_branch
        %152 = sbr.rel (%p150) target = $region24
      $region23: #{tpu_custom_call.1} parent=5 // pred_region
        // Predicated region
        $region25: #{tpu_custom_call.1} parent=23 // pred_check
          %p153 = pneg %p36
        $region26: #{tpu_custom_call.1} parent=23 // pred_check_branch
          %155 = sbr.rel (%p153) target = $region28
        $region27: #{tpu_custom_call.1} parent=23 // pred_region
          %s156 = sand.u32 %s26, 1
          %s157 = scalar_lea.sflag [#allocation3], %s156
          %s158 = sand.u32 %s26, 1
          %s159 = smul.addr %s158, 432
          %s160 = scalar_lea.vmem [#allocation2], %s159
          %s162 = ssub.s32 6912, 6912
          %163 = vsyncadd %s157, %s162
          %s164 = smul.addr %s16, 54
          %s165 = smul.addr %s164, 128
          %s166 = scalar_lea.hbm %s0, %s165
          %s167 = sshll.u32 %s160, 4
          %s168 = int_to_ptr.vmem [resolvable:$true] %s167
          %173 = dma.hbm_to_vmem [thread:$0]  %s166, 6912, %s168, %s157, 128, 128, 8
        $region28: #{tpu_custom_call.1} parent=23 // pred_fallthru
          _
      $region24: #{tpu_custom_call.1} parent=5 // pred_fallthru
        _
      %p174 = scmp.le.s32.totalorder 1, %s16
      %p175 = scmp.lt.s32.totalorder %s16, 3
      %p176 = pnand %p174, %p175
      %p177 = pneg %p176
      // Predicated region
      $region29: #{tpu_custom_call.1} parent=5 // pred_check
        _
      $region30: #{tpu_custom_call.1} parent=5 // pred_check_branch
        %179 = sbr.rel (%p176) target = $region32
      $region31: #{tpu_custom_call.1} parent=5 // pred_region
        %s180 = ssub.s32 %s16, 1
        %s181 = sand.u32 %s29, 1
        %s182 = scalar_lea.sflag [#allocation3], %s181
        %s183 = sand.u32 %s29, 1
        %s184 = smul.addr %s183, 432
        %s185 = scalar_lea.vmem [#allocation2], %s184
        // Predicated region
        $region33: #{tpu_custom_call.1} parent=31 // pred_check
          %p186 = pneg %p42
        $region34: #{tpu_custom_call.1} parent=31 // pred_check_branch
          %188 = sbr.rel (%p186) target = $region36
        $region35: #{tpu_custom_call.1} parent=31 // pred_region
          %189 = dma.done %s182, 6912
        $region36: #{tpu_custom_call.1} parent=31 // pred_fallthru
          _
        // Predicated region
        $region37: #{tpu_custom_call.1} parent=31 // pred_check
          %p190 = pneg %p63
        $region38: #{tpu_custom_call.1} parent=31 // pred_check_branch
          %192 = sbr.rel (%p190) target = $region40
        $region39: #{tpu_custom_call.1} parent=31 // pred_region
          %193 = dma.done [#allocation6], 640
        $region40: #{tpu_custom_call.1} parent=31 // pred_fallthru
          _
        // Predicated region
        $region41: #{tpu_custom_call.1} parent=31 // pred_check
          %p194 = pneg %p84
        $region42: #{tpu_custom_call.1} parent=31 // pred_check_branch
          %196 = sbr.rel (%p194) target = $region44
        $region43: #{tpu_custom_call.1} parent=31 // pred_region
          %197 = dma.done [#allocation6], 16
        $region44: #{tpu_custom_call.1} parent=31 // pred_fallthru
          _
        %s198 = sand.u32 %s29, 1
        %s199 = scalar_lea.sflag [#allocation3], %s198
        %s200 = sand.u32 %s29, 1
        %s201 = smul.addr %s200, 432
        %s202 = scalar_lea.vmem [#allocation2], %s201
        %p203 = pneg %p42
        %p204 = pneg %p39
        %p205 = pneg %p63
        %p206 = pneg %p60
        %p207 = pneg %p84
        %p208 = pneg %p81
        %p209 = pneg %p110
        %p210 = pneg %p107
        %s211 = sand.u32 %s97, 1
        %s212 = scalar_lea.sflag [#allocation4], %s211
        %s213 = sand.u32 %s97, 1
        %s214 = smul.addr %s213, 256
        %s215 = scalar_lea.vmem [#allocation8], %s214
        %v216 = vld [vmem:[%s185] sm:$0xff]
        %v217 = vld [vmem:[%s185 + $0x8] sm:$0xff]
        %v218 = vld [vmem:[%s185 + $0x18] sm:$0xff]
        %v219 = vld [vmem:[%s185 + $0x20] sm:$0xff]
        %v220 = vld [vmem:[%s185 + $0x30] sm:$0xff]
        %v221 = vld [vmem:[%s185 + $0x38] sm:$0xff]
        %v222 = vld [vmem:[%s185 + $0x48] sm:$0xff]
        %v223 = vld [vmem:[%s185 + $0x50] sm:$0xff]
        %v224 = vld [vmem:[%s185 + $0x60] sm:$0xff]
        %v225 = vld [vmem:[%s185 + $0x68] sm:$0xff]
        %v226 = vld [vmem:[%s185 + $0x78] sm:$0xff]
        %v227 = vld [vmem:[%s185 + $0x80] sm:$0xff]
        %v228 = vld [vmem:[%s185 + $0x90] sm:$0xff]
        %v229 = vld [vmem:[%s185 + $0x98] sm:$0xff]
        %v230 = vld [vmem:[%s185 + $0xa8] sm:$0xff]
        %v231 = vld [vmem:[%s185 + $0xb0] sm:$0xff]
        %v232 = vld [vmem:[%s185 + $0xc0] sm:$0xff]
        %v233 = vld [vmem:[%s185 + $0xc8] sm:$0xff]
        %v234 = vld [vmem:[%s185 + $0xd8] sm:$0xff]
        %v235 = vld [vmem:[%s185 + $0xe0] sm:$0xff]
        %v236 = vld [vmem:[%s185 + $0xf0] sm:$0xff]
        %v237 = vld [vmem:[%s185 + $0xf8] sm:$0xff]
        %v238 = vld [vmem:[%s185 + $0x108] sm:$0xff]
        %v239 = vld [vmem:[%s185 + $0x110] sm:$0xff]
        %v240 = vld [vmem:[%s185 + $0x120] sm:$0xff]
        %v241 = vld [vmem:[%s185 + $0x128] sm:$0xff]
        %v242 = vld [vmem:[%s185 + $0x138] sm:$0xff]
        %v243 = vld [vmem:[%s185 + $0x140] sm:$0xff]
        %v244 = vld [vmem:[%s185 + $0x150] sm:$0xff]
        %v245 = vld [vmem:[%s185 + $0x158] sm:$0xff]
        %v246 = vld [vmem:[%s185 + $0x168] sm:$0xff]
        %v247 = vld [vmem:[%s185 + $0x170] sm:$0xff]
        %v248 = vld [vmem:[%s185 + $0x180] sm:$0xff]
        %v249 = vld [vmem:[%s185 + $0x188] sm:$0xff]
        %v250 = vld [vmem:[%s185 + $0x198] sm:$0xff]
        %v251 = vld [vmem:[%s185 + $0x1a0] sm:$0xff]
        %v252 = vld [vmem:[%s185 + $0x1] sm:$0xff]
        %v253 = vld [vmem:[%s185 + $0x9] sm:$0xff]
        %v254 = vld [vmem:[%s185 + $0x19] sm:$0xff]
        %v255 = vld [vmem:[%s185 + $0x21] sm:$0xff]
        %v256 = vld [vmem:[%s185 + $0x31] sm:$0xff]
        %v257 = vld [vmem:[%s185 + $0x39] sm:$0xff]
        %v258 = vld [vmem:[%s185 + $0x49] sm:$0xff]
        %v259 = vld [vmem:[%s185 + $0x51] sm:$0xff]
        %v260 = vld [vmem:[%s185 + $0x61] sm:$0xff]
        %v261 = vld [vmem:[%s185 + $0x69] sm:$0xff]
        %v262 = vld [vmem:[%s185 + $0x79] sm:$0xff]
        %v263 = vld [vmem:[%s185 + $0x81] sm:$0xff]
        %v264 = vld [vmem:[%s185 + $0x91] sm:$0xff]
        %v265 = vld [vmem:[%s185 + $0x99] sm:$0xff]
        %v266 = vld [vmem:[%s185 + $0xa9] sm:$0xff]
        %v267 = vld [vmem:[%s185 + $0xb1] sm:$0xff]
        %v268 = vld [vmem:[%s185 + $0xc1] sm:$0xff]
        %v269 = vld [vmem:[%s185 + $0xc9] sm:$0xff]
        %v270 = vld [vmem:[%s185 + $0xd9] sm:$0xff]
        %v271 = vld [vmem:[%s185 + $0xe1] sm:$0xff]
        %v272 = vld [vmem:[%s185 + $0xf1] sm:$0xff]
        %v273 = vld [vmem:[%s185 + $0xf9] sm:$0xff]
        %v274 = vld [vmem:[%s185 + $0x109] sm:$0xff]
        %v275 = vld [vmem:[%s185 + $0x111] sm:$0xff]
        %v276 = vld [vmem:[%s185 + $0x121] sm:$0xff]
        %v277 = vld [vmem:[%s185 + $0x129] sm:$0xff]
        %v278 = vld [vmem:[%s185 + $0x139] sm:$0xff]
        %v279 = vld [vmem:[%s185 + $0x141] sm:$0xff]
        %v280 = vld [vmem:[%s185 + $0x151] sm:$0xff]
        %v281 = vld [vmem:[%s185 + $0x159] sm:$0xff]
        %v282 = vld [vmem:[%s185 + $0x169] sm:$0xff]
        %v283 = vld [vmem:[%s185 + $0x171] sm:$0xff]
        %v284 = vld [vmem:[%s185 + $0x181] sm:$0xff]
        %v285 = vld [vmem:[%s185 + $0x189] sm:$0xff]
        %v286 = vld [vmem:[%s185 + $0x199] sm:$0xff]
        %v287 = vld [vmem:[%s185 + $0x1a1] sm:$0xff]
        %v288 = vld [vmem:[%s185 + $0x2] sm:$0xff]
        %v289 = vld [vmem:[%s185 + $0xa] sm:$0xff]
        %v290 = vld [vmem:[%s185 + $0x1a] sm:$0xff]
        %v291 = vld [vmem:[%s185 + $0x22] sm:$0xff]
        %v292 = vld [vmem:[%s185 + $0x32] sm:$0xff]
        %v293 = vld [vmem:[%s185 + $0x3a] sm:$0xff]
        %v294 = vld [vmem:[%s185 + $0x4a] sm:$0xff]
        %v295 = vld [vmem:[%s185 + $0x52] sm:$0xff]
        %v296 = vld [vmem:[%s185 + $0x62] sm:$0xff]
        %v297 = vld [vmem:[%s185 + $0x6a] sm:$0xff]
        %v298 = vld [vmem:[%s185 + $0x7a] sm:$0xff]
        %v299 = vld [vmem:[%s185 + $0x82] sm:$0xff]
        %v300 = vld [vmem:[%s185 + $0x92] sm:$0xff]
        %v301 = vld [vmem:[%s185 + $0x9a] sm:$0xff]
        %v302 = vld [vmem:[%s185 + $0xaa] sm:$0xff]
        %v303 = vld [vmem:[%s185 + $0xb2] sm:$0xff]
        %v304 = vld [vmem:[%s185 + $0xc2] sm:$0xff]
        %v305 = vld [vmem:[%s185 + $0xca] sm:$0xff]
        %v306 = vld [vmem:[%s185 + $0xda] sm:$0xff]
        %v307 = vld [vmem:[%s185 + $0xe2] sm:$0xff]
        %v308 = vld [vmem:[%s185 + $0xf2] sm:$0xff]
        %v309 = vld [vmem:[%s185 + $0xfa] sm:$0xff]
        %v310 = vld [vmem:[%s185 + $0x10a] sm:$0xff]
        %v311 = vld [vmem:[%s185 + $0x112] sm:$0xff]
        %v312 = vld [vmem:[%s185 + $0x122] sm:$0xff]
        %v313 = vld [vmem:[%s185 + $0x12a] sm:$0xff]
        %v314 = vld [vmem:[%s185 + $0x13a] sm:$0xff]
        %v315 = vld [vmem:[%s185 + $0x142] sm:$0xff]
        %v316 = vld [vmem:[%s185 + $0x152] sm:$0xff]
        %v317 = vld [vmem:[%s185 + $0x15a] sm:$0xff]
        %v318 = vld [vmem:[%s185 + $0x16a] sm:$0xff]
        %v319 = vld [vmem:[%s185 + $0x172] sm:$0xff]
        %v320 = vld [vmem:[%s185 + $0x182] sm:$0xff]
        %v321 = vld [vmem:[%s185 + $0x18a] sm:$0xff]
        %v322 = vld [vmem:[%s185 + $0x19a] sm:$0xff]
        %v323 = vld [vmem:[%s185 + $0x1a2] sm:$0xff]
        %356 = vrot.lane.b32.xlu0 %v218, 4
        %v357 = vpop.permute.xlu0 %356
        %358 = vrot.lane.b32.xlu0 %v219, 4
        %v359 = vpop.permute.xlu0 %358
        %360 = vrot.lane.b32.xlu0 %v220, 4
        %v361 = vpop.permute.xlu0 %360
        %362 = vrot.lane.b32.xlu0 %v221, 4
        %v363 = vpop.permute.xlu0 %362
        %364 = vrot.lane.b32.xlu0 %v222, 4
        %v365 = vpop.permute.xlu0 %364
        %366 = vrot.lane.b32.xlu0 %v223, 4
        %v367 = vpop.permute.xlu0 %366
        %368 = vrot.lane.b32.xlu0 %v224, 4
        %v369 = vpop.permute.xlu0 %368
        %370 = vrot.lane.b32.xlu0 %v225, 4
        %v371 = vpop.permute.xlu0 %370
        %372 = vrot.lane.b32.xlu0 %v226, 4
        %v373 = vpop.permute.xlu0 %372
        %374 = vrot.lane.b32.xlu0 %v227, 4
        %v375 = vpop.permute.xlu0 %374
        %376 = vrot.lane.b32.xlu0 %v228, 4
        %v377 = vpop.permute.xlu0 %376
        %378 = vrot.lane.b32.xlu0 %v229, 4
        %v379 = vpop.permute.xlu0 %378
        %380 = vrot.lane.b32.xlu0 %v230, 4
        %v381 = vpop.permute.xlu0 %380
        %382 = vrot.lane.b32.xlu0 %v231, 4
        %v383 = vpop.permute.xlu0 %382
        %384 = vrot.lane.b32.xlu0 %v232, 4
        %v385 = vpop.permute.xlu0 %384
        %386 = vrot.lane.b32.xlu0 %v233, 4
        %v387 = vpop.permute.xlu0 %386
        %388 = vrot.lane.b32.xlu0 %v234, 4
        %v389 = vpop.permute.xlu0 %388
        %390 = vrot.lane.b32.xlu0 %v235, 4
        %v391 = vpop.permute.xlu0 %390
        %392 = vrot.lane.b32.xlu0 %v236, 4
        %v393 = vpop.permute.xlu0 %392
        %394 = vrot.lane.b32.xlu0 %v237, 4
        %v395 = vpop.permute.xlu0 %394
        %396 = vrot.lane.b32.xlu0 %v238, 4
        %v397 = vpop.permute.xlu0 %396
        %398 = vrot.lane.b32.xlu0 %v239, 4
        %v399 = vpop.permute.xlu0 %398
        %400 = vrot.lane.b32.xlu0 %v240, 4
        %v401 = vpop.permute.xlu0 %400
        %402 = vrot.lane.b32.xlu0 %v241, 4
        %v403 = vpop.permute.xlu0 %402
        %404 = vrot.lane.b32.xlu0 %v242, 4
        %v405 = vpop.permute.xlu0 %404
        %406 = vrot.lane.b32.xlu0 %v243, 4
        %v407 = vpop.permute.xlu0 %406
        %408 = vrot.lane.b32.xlu0 %v244, 4
        %v409 = vpop.permute.xlu0 %408
        %410 = vrot.lane.b32.xlu0 %v245, 4
        %v411 = vpop.permute.xlu0 %410
        %412 = vrot.lane.b32.xlu0 %v246, 4
        %v413 = vpop.permute.xlu0 %412
        %414 = vrot.lane.b32.xlu0 %v247, 4
        %v415 = vpop.permute.xlu0 %414
        %416 = vrot.lane.b32.xlu0 %v248, 4
        %v417 = vpop.permute.xlu0 %416
        %418 = vrot.lane.b32.xlu0 %v249, 4
        %v419 = vpop.permute.xlu0 %418
        %454 = vrot.lane.b32.xlu0 %v220, 8
        %v455 = vpop.permute.xlu0 %454
        %456 = vrot.lane.b32.xlu0 %v221, 8
        %v457 = vpop.permute.xlu0 %456
        %458 = vrot.lane.b32.xlu0 %v222, 8
        %v459 = vpop.permute.xlu0 %458
        %460 = vrot.lane.b32.xlu0 %v223, 8
        %v461 = vpop.permute.xlu0 %460
        %462 = vrot.lane.b32.xlu0 %v224, 8
        %v463 = vpop.permute.xlu0 %462
        %464 = vrot.lane.b32.xlu0 %v225, 8
        %v465 = vpop.permute.xlu0 %464
        %466 = vrot.lane.b32.xlu0 %v226, 8
        %v467 = vpop.permute.xlu0 %466
        %468 = vrot.lane.b32.xlu0 %v227, 8
        %v469 = vpop.permute.xlu0 %468
        %470 = vrot.lane.b32.xlu0 %v228, 8
        %v471 = vpop.permute.xlu0 %470
        %472 = vrot.lane.b32.xlu0 %v229, 8
        %v473 = vpop.permute.xlu0 %472
        %474 = vrot.lane.b32.xlu0 %v230, 8
        %v475 = vpop.permute.xlu0 %474
        %476 = vrot.lane.b32.xlu0 %v231, 8
        %v477 = vpop.permute.xlu0 %476
        %478 = vrot.lane.b32.xlu0 %v232, 8
        %v479 = vpop.permute.xlu0 %478
        %480 = vrot.lane.b32.xlu0 %v233, 8
        %v481 = vpop.permute.xlu0 %480
        %482 = vrot.lane.b32.xlu0 %v234, 8
        %v483 = vpop.permute.xlu0 %482
        %484 = vrot.lane.b32.xlu0 %v235, 8
        %v485 = vpop.permute.xlu0 %484
        %486 = vrot.lane.b32.xlu0 %v236, 8
        %v487 = vpop.permute.xlu0 %486
        %488 = vrot.lane.b32.xlu0 %v237, 8
        %v489 = vpop.permute.xlu0 %488
        %490 = vrot.lane.b32.xlu0 %v238, 8
        %v491 = vpop.permute.xlu0 %490
        %492 = vrot.lane.b32.xlu0 %v239, 8
        %v493 = vpop.permute.xlu0 %492
        %494 = vrot.lane.b32.xlu0 %v240, 8
        %v495 = vpop.permute.xlu0 %494
        %496 = vrot.lane.b32.xlu0 %v241, 8
        %v497 = vpop.permute.xlu0 %496
        %498 = vrot.lane.b32.xlu0 %v242, 8
        %v499 = vpop.permute.xlu0 %498
        %500 = vrot.lane.b32.xlu0 %v243, 8
        %v501 = vpop.permute.xlu0 %500
        %502 = vrot.lane.b32.xlu0 %v244, 8
        %v503 = vpop.permute.xlu0 %502
        %504 = vrot.lane.b32.xlu0 %v245, 8
        %v505 = vpop.permute.xlu0 %504
        %506 = vrot.lane.b32.xlu0 %v246, 8
        %v507 = vpop.permute.xlu0 %506
        %508 = vrot.lane.b32.xlu0 %v247, 8
        %v509 = vpop.permute.xlu0 %508
        %510 = vrot.lane.b32.xlu0 %v248, 8
        %v511 = vpop.permute.xlu0 %510
        %512 = vrot.lane.b32.xlu0 %v249, 8
        %v513 = vpop.permute.xlu0 %512
        %514 = vrot.lane.b32.xlu0 %v250, 8
        %v515 = vpop.permute.xlu0 %514
        %516 = vrot.lane.b32.xlu0 %v251, 8
        %v517 = vpop.permute.xlu0 %516
        %582 = vrot.lane.b32.xlu0 %v252, 12
        %v583 = vpop.permute.xlu0 %582
        %584 = vrot.lane.b32.xlu0 %v253, 12
        %v585 = vpop.permute.xlu0 %584
        %586 = vrot.lane.b32.xlu0 %v254, 12
        %v587 = vpop.permute.xlu0 %586
        %588 = vrot.lane.b32.xlu0 %v255, 12
        %v589 = vpop.permute.xlu0 %588
        %590 = vrot.lane.b32.xlu0 %v256, 12
        %v591 = vpop.permute.xlu0 %590
        %592 = vrot.lane.b32.xlu0 %v257, 12
        %v593 = vpop.permute.xlu0 %592
        %594 = vrot.lane.b32.xlu0 %v258, 12
        %v595 = vpop.permute.xlu0 %594
        %596 = vrot.lane.b32.xlu0 %v259, 12
        %v597 = vpop.permute.xlu0 %596
        %598 = vrot.lane.b32.xlu0 %v260, 12
        %v599 = vpop.permute.xlu0 %598
        %600 = vrot.lane.b32.xlu0 %v261, 12
        %v601 = vpop.permute.xlu0 %600
        %602 = vrot.lane.b32.xlu0 %v262, 12
        %v603 = vpop.permute.xlu0 %602
        %604 = vrot.lane.b32.xlu0 %v263, 12
        %v605 = vpop.permute.xlu0 %604
        %606 = vrot.lane.b32.xlu0 %v264, 12
        %v607 = vpop.permute.xlu0 %606
        %608 = vrot.lane.b32.xlu0 %v265, 12
        %v609 = vpop.permute.xlu0 %608
        %610 = vrot.lane.b32.xlu0 %v266, 12
        %v611 = vpop.permute.xlu0 %610
        %612 = vrot.lane.b32.xlu0 %v267, 12
        %v613 = vpop.permute.xlu0 %612
        %614 = vrot.lane.b32.xlu0 %v268, 12
        %v615 = vpop.permute.xlu0 %614
        %616 = vrot.lane.b32.xlu0 %v269, 12
        %v617 = vpop.permute.xlu0 %616
        %618 = vrot.lane.b32.xlu0 %v270, 12
        %v619 = vpop.permute.xlu0 %618
        %620 = vrot.lane.b32.xlu0 %v271, 12
        %v621 = vpop.permute.xlu0 %620
        %622 = vrot.lane.b32.xlu0 %v272, 12
        %v623 = vpop.permute.xlu0 %622
        %624 = vrot.lane.b32.xlu0 %v273, 12
        %v625 = vpop.permute.xlu0 %624
        %626 = vrot.lane.b32.xlu0 %v274, 12
        %v627 = vpop.permute.xlu0 %626
        %628 = vrot.lane.b32.xlu0 %v275, 12
        %v629 = vpop.permute.xlu0 %628
        %630 = vrot.lane.b32.xlu0 %v276, 12
        %v631 = vpop.permute.xlu0 %630
        %632 = vrot.lane.b32.xlu0 %v277, 12
        %v633 = vpop.permute.xlu0 %632
        %634 = vrot.lane.b32.xlu0 %v278, 12
        %v635 = vpop.permute.xlu0 %634
        %636 = vrot.lane.b32.xlu0 %v279, 12
        %v637 = vpop.permute.xlu0 %636
        %638 = vrot.lane.b32.xlu0 %v280, 12
        %v639 = vpop.permute.xlu0 %638
        %640 = vrot.lane.b32.xlu0 %v281, 12
        %v641 = vpop.permute.xlu0 %640
        %642 = vrot.lane.b32.xlu0 %v282, 12
        %v643 = vpop.permute.xlu0 %642
        %644 = vrot.lane.b32.xlu0 %v283, 12
        %v645 = vpop.permute.xlu0 %644
        %680 = vrot.lane.b32.xlu0 %v254, 16
        %v681 = vpop.permute.xlu0 %680
        %682 = vrot.lane.b32.xlu0 %v255, 16
        %v683 = vpop.permute.xlu0 %682
        %684 = vrot.lane.b32.xlu0 %v256, 16
        %v685 = vpop.permute.xlu0 %684
        %686 = vrot.lane.b32.xlu0 %v257, 16
        %v687 = vpop.permute.xlu0 %686
        %688 = vrot.lane.b32.xlu0 %v258, 16
        %v689 = vpop.permute.xlu0 %688
        %690 = vrot.lane.b32.xlu0 %v259, 16
        %v691 = vpop.permute.xlu0 %690
        %692 = vrot.lane.b32.xlu0 %v260, 16
        %v693 = vpop.permute.xlu0 %692
        %694 = vrot.lane.b32.xlu0 %v261, 16
        %v695 = vpop.permute.xlu0 %694
        %696 = vrot.lane.b32.xlu0 %v262, 16
        %v697 = vpop.permute.xlu0 %696
        %698 = vrot.lane.b32.xlu0 %v263, 16
        %v699 = vpop.permute.xlu0 %698
        %700 = vrot.lane.b32.xlu0 %v264, 16
        %v701 = vpop.permute.xlu0 %700
        %702 = vrot.lane.b32.xlu0 %v265, 16
        %v703 = vpop.permute.xlu0 %702
        %704 = vrot.lane.b32.xlu0 %v266, 16
        %v705 = vpop.permute.xlu0 %704
        %706 = vrot.lane.b32.xlu0 %v267, 16
        %v707 = vpop.permute.xlu0 %706
        %708 = vrot.lane.b32.xlu0 %v268, 16
        %v709 = vpop.permute.xlu0 %708
        %710 = vrot.lane.b32.xlu0 %v269, 16
        %v711 = vpop.permute.xlu0 %710
        %712 = vrot.lane.b32.xlu0 %v270, 16
        %v713 = vpop.permute.xlu0 %712
        %714 = vrot.lane.b32.xlu0 %v271, 16
        %v715 = vpop.permute.xlu0 %714
        %716 = vrot.lane.b32.xlu0 %v272, 16
        %v717 = vpop.permute.xlu0 %716
        %718 = vrot.lane.b32.xlu0 %v273, 16
        %v719 = vpop.permute.xlu0 %718
        %720 = vrot.lane.b32.xlu0 %v274, 16
        %v721 = vpop.permute.xlu0 %720
        %722 = vrot.lane.b32.xlu0 %v275, 16
        %v723 = vpop.permute.xlu0 %722
        %724 = vrot.lane.b32.xlu0 %v276, 16
        %v725 = vpop.permute.xlu0 %724
        %726 = vrot.lane.b32.xlu0 %v277, 16
        %v727 = vpop.permute.xlu0 %726
        %728 = vrot.lane.b32.xlu0 %v278, 16
        %v729 = vpop.permute.xlu0 %728
        %730 = vrot.lane.b32.xlu0 %v279, 16
        %v731 = vpop.permute.xlu0 %730
        %732 = vrot.lane.b32.xlu0 %v280, 16
        %v733 = vpop.permute.xlu0 %732
        %734 = vrot.lane.b32.xlu0 %v281, 16
        %v735 = vpop.permute.xlu0 %734
        %736 = vrot.lane.b32.xlu0 %v282, 16
        %v737 = vpop.permute.xlu0 %736
        %738 = vrot.lane.b32.xlu0 %v283, 16
        %v739 = vpop.permute.xlu0 %738
        %740 = vrot.lane.b32.xlu0 %v284, 16
        %v741 = vpop.permute.xlu0 %740
        %742 = vrot.lane.b32.xlu0 %v285, 16
        %v743 = vpop.permute.xlu0 %742
        %778 = vrot.lane.b32.xlu0 %v256, 20
        %v779 = vpop.permute.xlu0 %778
        %780 = vrot.lane.b32.xlu0 %v257, 20
        %v781 = vpop.permute.xlu0 %780
        %782 = vrot.lane.b32.xlu0 %v258, 20
        %v783 = vpop.permute.xlu0 %782
        %784 = vrot.lane.b32.xlu0 %v259, 20
        %v785 = vpop.permute.xlu0 %784
        %786 = vrot.lane.b32.xlu0 %v260, 20
        %v787 = vpop.permute.xlu0 %786
        %788 = vrot.lane.b32.xlu0 %v261, 20
        %v789 = vpop.permute.xlu0 %788
        %790 = vrot.lane.b32.xlu0 %v262, 20
        %v791 = vpop.permute.xlu0 %790
        %792 = vrot.lane.b32.xlu0 %v263, 20
        %v793 = vpop.permute.xlu0 %792
        %794 = vrot.lane.b32.xlu0 %v264, 20
        %v795 = vpop.permute.xlu0 %794
        %796 = vrot.lane.b32.xlu0 %v265, 20
        %v797 = vpop.permute.xlu0 %796
        %798 = vrot.lane.b32.xlu0 %v266, 20
        %v799 = vpop.permute.xlu0 %798
        %800 = vrot.lane.b32.xlu0 %v267, 20
        %v801 = vpop.permute.xlu0 %800
        %802 = vrot.lane.b32.xlu0 %v268, 20
        %v803 = vpop.permute.xlu0 %802
        %804 = vrot.lane.b32.xlu0 %v269, 20
        %v805 = vpop.permute.xlu0 %804
        %806 = vrot.lane.b32.xlu0 %v270, 20
        %v807 = vpop.permute.xlu0 %806
        %808 = vrot.lane.b32.xlu0 %v271, 20
        %v809 = vpop.permute.xlu0 %808
        %810 = vrot.lane.b32.xlu0 %v272, 20
        %v811 = vpop.permute.xlu0 %810
        %812 = vrot.lane.b32.xlu0 %v273, 20
        %v813 = vpop.permute.xlu0 %812
        %814 = vrot.lane.b32.xlu0 %v274, 20
        %v815 = vpop.permute.xlu0 %814
        %816 = vrot.lane.b32.xlu0 %v275, 20
        %v817 = vpop.permute.xlu0 %816
        %818 = vrot.lane.b32.xlu0 %v276, 20
        %v819 = vpop.permute.xlu0 %818
        %820 = vrot.lane.b32.xlu0 %v277, 20
        %v821 = vpop.permute.xlu0 %820
        %822 = vrot.lane.b32.xlu0 %v278, 20
        %v823 = vpop.permute.xlu0 %822
        %824 = vrot.lane.b32.xlu0 %v279, 20
        %v825 = vpop.permute.xlu0 %824
        %826 = vrot.lane.b32.xlu0 %v280, 20
        %v827 = vpop.permute.xlu0 %826
        %828 = vrot.lane.b32.xlu0 %v281, 20
        %v829 = vpop.permute.xlu0 %828
        %830 = vrot.lane.b32.xlu0 %v282, 20
        %v831 = vpop.permute.xlu0 %830
        %832 = vrot.lane.b32.xlu0 %v283, 20
        %v833 = vpop.permute.xlu0 %832
        %834 = vrot.lane.b32.xlu0 %v284, 20
        %v835 = vpop.permute.xlu0 %834
        %836 = vrot.lane.b32.xlu0 %v285, 20
        %v837 = vpop.permute.xlu0 %836
        %838 = vrot.lane.b32.xlu0 %v286, 20
        %v839 = vpop.permute.xlu0 %838
        %840 = vrot.lane.b32.xlu0 %v287, 20
        %v841 = vpop.permute.xlu0 %840
        %906 = vrot.lane.b32.xlu0 %v288, 24
        %v907 = vpop.permute.xlu0 %906
        %908 = vrot.lane.b32.xlu0 %v289, 24
        %v909 = vpop.permute.xlu0 %908
        %910 = vrot.lane.b32.xlu0 %v290, 24
        %v911 = vpop.permute.xlu0 %910
        %912 = vrot.lane.b32.xlu0 %v291, 24
        %v913 = vpop.permute.xlu0 %912
        %914 = vrot.lane.b32.xlu0 %v292, 24
        %v915 = vpop.permute.xlu0 %914
        %916 = vrot.lane.b32.xlu0 %v293, 24
        %v917 = vpop.permute.xlu0 %916
        %918 = vrot.lane.b32.xlu0 %v294, 24
        %v919 = vpop.permute.xlu0 %918
        %920 = vrot.lane.b32.xlu0 %v295, 24
        %v921 = vpop.permute.xlu0 %920
        %922 = vrot.lane.b32.xlu0 %v296, 24
        %v923 = vpop.permute.xlu0 %922
        %924 = vrot.lane.b32.xlu0 %v297, 24
        %v925 = vpop.permute.xlu0 %924
        %926 = vrot.lane.b32.xlu0 %v298, 24
        %v927 = vpop.permute.xlu0 %926
        %928 = vrot.lane.b32.xlu0 %v299, 24
        %v929 = vpop.permute.xlu0 %928
        %930 = vrot.lane.b32.xlu0 %v300, 24
        %v931 = vpop.permute.xlu0 %930
        %932 = vrot.lane.b32.xlu0 %v301, 24
        %v933 = vpop.permute.xlu0 %932
        %934 = vrot.lane.b32.xlu0 %v302, 24
        %v935 = vpop.permute.xlu0 %934
        %936 = vrot.lane.b32.xlu0 %v303, 24
        %v937 = vpop.permute.xlu0 %936
        %938 = vrot.lane.b32.xlu0 %v304, 24
        %v939 = vpop.permute.xlu0 %938
        %940 = vrot.lane.b32.xlu0 %v305, 24
        %v941 = vpop.permute.xlu0 %940
        %942 = vrot.lane.b32.xlu0 %v306, 24
        %v943 = vpop.permute.xlu0 %942
        %944 = vrot.lane.b32.xlu0 %v307, 24
        %v945 = vpop.permute.xlu0 %944
        %946 = vrot.lane.b32.xlu0 %v308, 24
        %v947 = vpop.permute.xlu0 %946
        %948 = vrot.lane.b32.xlu0 %v309, 24
        %v949 = vpop.permute.xlu0 %948
        %950 = vrot.lane.b32.xlu0 %v310, 24
        %v951 = vpop.permute.xlu0 %950
        %952 = vrot.lane.b32.xlu0 %v311, 24
        %v953 = vpop.permute.xlu0 %952
        %954 = vrot.lane.b32.xlu0 %v312, 24
        %v955 = vpop.permute.xlu0 %954
        %956 = vrot.lane.b32.xlu0 %v313, 24
        %v957 = vpop.permute.xlu0 %956
        %958 = vrot.lane.b32.xlu0 %v314, 24
        %v959 = vpop.permute.xlu0 %958
        %960 = vrot.lane.b32.xlu0 %v315, 24
        %v961 = vpop.permute.xlu0 %960
        %962 = vrot.lane.b32.xlu0 %v316, 24
        %v963 = vpop.permute.xlu0 %962
        %964 = vrot.lane.b32.xlu0 %v317, 24
        %v965 = vpop.permute.xlu0 %964
        %966 = vrot.lane.b32.xlu0 %v318, 24
        %v967 = vpop.permute.xlu0 %966
        %968 = vrot.lane.b32.xlu0 %v319, 24
        %v969 = vpop.permute.xlu0 %968
        %1004 = vrot.lane.b32.xlu0 %v290, 28
        %v1005 = vpop.permute.xlu0 %1004
        %1006 = vrot.lane.b32.xlu0 %v291, 28
        %v1007 = vpop.permute.xlu0 %1006
        %1008 = vrot.lane.b32.xlu0 %v292, 28
        %v1009 = vpop.permute.xlu0 %1008
        %1010 = vrot.lane.b32.xlu0 %v293, 28
        %v1011 = vpop.permute.xlu0 %1010
        %1012 = vrot.lane.b32.xlu0 %v294, 28
        %v1013 = vpop.permute.xlu0 %1012
        %1014 = vrot.lane.b32.xlu0 %v295, 28
        %v1015 = vpop.permute.xlu0 %1014
        %1016 = vrot.lane.b32.xlu0 %v296, 28
        %v1017 = vpop.permute.xlu0 %1016
        %1018 = vrot.lane.b32.xlu0 %v297, 28
        %v1019 = vpop.permute.xlu0 %1018
        %1020 = vrot.lane.b32.xlu0 %v298, 28
        %v1021 = vpop.permute.xlu0 %1020
        %1022 = vrot.lane.b32.xlu0 %v299, 28
        %v1023 = vpop.permute.xlu0 %1022
        %1024 = vrot.lane.b32.xlu0 %v300, 28
        %v1025 = vpop.permute.xlu0 %1024
        %1026 = vrot.lane.b32.xlu0 %v301, 28
        %v1027 = vpop.permute.xlu0 %1026
        %1028 = vrot.lane.b32.xlu0 %v302, 28
        %v1029 = vpop.permute.xlu0 %1028
        %1030 = vrot.lane.b32.xlu0 %v303, 28
        %v1031 = vpop.permute.xlu0 %1030
        %1032 = vrot.lane.b32.xlu0 %v304, 28
        %v1033 = vpop.permute.xlu0 %1032
        %1034 = vrot.lane.b32.xlu0 %v305, 28
        %v1035 = vpop.permute.xlu0 %1034
        %1036 = vrot.lane.b32.xlu0 %v306, 28
        %v1037 = vpop.permute.xlu0 %1036
        %1038 = vrot.lane.b32.xlu0 %v307, 28
        %v1039 = vpop.permute.xlu0 %1038
        %1040 = vrot.lane.b32.xlu0 %v308, 28
        %v1041 = vpop.permute.xlu0 %1040
        %1042 = vrot.lane.b32.xlu0 %v309, 28
        %v1043 = vpop.permute.xlu0 %1042
        %1044 = vrot.lane.b32.xlu0 %v310, 28
        %v1045 = vpop.permute.xlu0 %1044
        %1046 = vrot.lane.b32.xlu0 %v311, 28
        %v1047 = vpop.permute.xlu0 %1046
        %1048 = vrot.lane.b32.xlu0 %v312, 28
        %v1049 = vpop.permute.xlu0 %1048
        %1050 = vrot.lane.b32.xlu0 %v313, 28
        %v1051 = vpop.permute.xlu0 %1050
        %1052 = vrot.lane.b32.xlu0 %v314, 28
        %v1053 = vpop.permute.xlu0 %1052
        %1054 = vrot.lane.b32.xlu0 %v315, 28
        %v1055 = vpop.permute.xlu0 %1054
        %1056 = vrot.lane.b32.xlu0 %v316, 28
        %v1057 = vpop.permute.xlu0 %1056
        %1058 = vrot.lane.b32.xlu0 %v317, 28
        %v1059 = vpop.permute.xlu0 %1058
        %1060 = vrot.lane.b32.xlu0 %v318, 28
        %v1061 = vpop.permute.xlu0 %1060
        %1062 = vrot.lane.b32.xlu0 %v319, 28
        %v1063 = vpop.permute.xlu0 %1062
        %1064 = vrot.lane.b32.xlu0 %v320, 28
        %v1065 = vpop.permute.xlu0 %1064
        %1066 = vrot.lane.b32.xlu0 %v321, 28
        %v1067 = vpop.permute.xlu0 %1066
        %1102 = vrot.lane.b32.xlu0 %v292, 32
        %v1103 = vpop.permute.xlu0 %1102
        %1104 = vrot.lane.b32.xlu0 %v293, 32
        %v1105 = vpop.permute.xlu0 %1104
        %1106 = vrot.lane.b32.xlu0 %v294, 32
        %v1107 = vpop.permute.xlu0 %1106
        %1108 = vrot.lane.b32.xlu0 %v295, 32
        %v1109 = vpop.permute.xlu0 %1108
        %1110 = vrot.lane.b32.xlu0 %v296, 32
        %v1111 = vpop.permute.xlu0 %1110
        %1112 = vrot.lane.b32.xlu0 %v297, 32
        %v1113 = vpop.permute.xlu0 %1112
        %1114 = vrot.lane.b32.xlu0 %v298, 32
        %v1115 = vpop.permute.xlu0 %1114
        %1116 = vrot.lane.b32.xlu0 %v299, 32
        %v1117 = vpop.permute.xlu0 %1116
        %1118 = vrot.lane.b32.xlu0 %v300, 32
        %v1119 = vpop.permute.xlu0 %1118
        %1120 = vrot.lane.b32.xlu0 %v301, 32
        %v1121 = vpop.permute.xlu0 %1120
        %1122 = vrot.lane.b32.xlu0 %v302, 32
        %v1123 = vpop.permute.xlu0 %1122
        %1124 = vrot.lane.b32.xlu0 %v303, 32
        %v1125 = vpop.permute.xlu0 %1124
        %1126 = vrot.lane.b32.xlu0 %v304, 32
        %v1127 = vpop.permute.xlu0 %1126
        %1128 = vrot.lane.b32.xlu0 %v305, 32
        %v1129 = vpop.permute.xlu0 %1128
        %1130 = vrot.lane.b32.xlu0 %v306, 32
        %v1131 = vpop.permute.xlu0 %1130
        %1132 = vrot.lane.b32.xlu0 %v307, 32
        %v1133 = vpop.permute.xlu0 %1132
        %1134 = vrot.lane.b32.xlu0 %v308, 32
        %v1135 = vpop.permute.xlu0 %1134
        %1136 = vrot.lane.b32.xlu0 %v309, 32
        %v1137 = vpop.permute.xlu0 %1136
        %1138 = vrot.lane.b32.xlu0 %v310, 32
        %v1139 = vpop.permute.xlu0 %1138
        %1140 = vrot.lane.b32.xlu0 %v311, 32
        %v1141 = vpop.permute.xlu0 %1140
        %1142 = vrot.lane.b32.xlu0 %v312, 32
        %v1143 = vpop.permute.xlu0 %1142
        %1144 = vrot.lane.b32.xlu0 %v313, 32
        %v1145 = vpop.permute.xlu0 %1144
        %1146 = vrot.lane.b32.xlu0 %v314, 32
        %v1147 = vpop.permute.xlu0 %1146
        %1148 = vrot.lane.b32.xlu0 %v315, 32
        %v1149 = vpop.permute.xlu0 %1148
        %1150 = vrot.lane.b32.xlu0 %v316, 32
        %v1151 = vpop.permute.xlu0 %1150
        %1152 = vrot.lane.b32.xlu0 %v317, 32
        %v1153 = vpop.permute.xlu0 %1152
        %1154 = vrot.lane.b32.xlu0 %v318, 32
        %v1155 = vpop.permute.xlu0 %1154
        %1156 = vrot.lane.b32.xlu0 %v319, 32
        %v1157 = vpop.permute.xlu0 %1156
        %1158 = vrot.lane.b32.xlu0 %v320, 32
        %v1159 = vpop.permute.xlu0 %1158
        %1160 = vrot.lane.b32.xlu0 %v321, 32
        %v1161 = vpop.permute.xlu0 %1160
        %1162 = vrot.lane.b32.xlu0 %v322, 32
        %v1163 = vpop.permute.xlu0 %1162
        %1164 = vrot.lane.b32.xlu0 %v323, 32
        %v1165 = vpop.permute.xlu0 %1164
        %vm1198 = vcmask 31744
        %v1199 = vsel %vm1198, %v216, %v357
        %v1200 = vsel %vm1198, %v217, %v359
        %v1201 = vsel %vm1198, %v218, %v361
        %v1202 = vsel %vm1198, %v219, %v363
        %v1203 = vsel %vm1198, %v220, %v365
        %v1204 = vsel %vm1198, %v221, %v367
        %v1205 = vsel %vm1198, %v222, %v369
        %v1206 = vsel %vm1198, %v223, %v371
        %v1207 = vsel %vm1198, %v224, %v373
        %v1208 = vsel %vm1198, %v225, %v375
        %v1209 = vsel %vm1198, %v226, %v377
        %v1210 = vsel %vm1198, %v227, %v379
        %v1211 = vsel %vm1198, %v228, %v381
        %v1212 = vsel %vm1198, %v229, %v383
        %v1213 = vsel %vm1198, %v230, %v385
        %v1214 = vsel %vm1198, %v231, %v387
        %v1215 = vsel %vm1198, %v232, %v389
        %v1216 = vsel %vm1198, %v233, %v391
        %v1217 = vsel %vm1198, %v234, %v393
        %v1218 = vsel %vm1198, %v235, %v395
        %v1219 = vsel %vm1198, %v236, %v397
        %v1220 = vsel %vm1198, %v237, %v399
        %v1221 = vsel %vm1198, %v238, %v401
        %v1222 = vsel %vm1198, %v239, %v403
        %v1223 = vsel %vm1198, %v240, %v405
        %v1224 = vsel %vm1198, %v241, %v407
        %v1225 = vsel %vm1198, %v242, %v409
        %v1226 = vsel %vm1198, %v243, %v411
        %v1227 = vsel %vm1198, %v244, %v413
        %v1228 = vsel %vm1198, %v245, %v415
        %v1229 = vsel %vm1198, %v246, %v417
        %v1230 = vsel %vm1198, %v247, %v419
        %vm1231 = vcmask 64512
        %v1232 = vsel %vm1231, %v1199, %v455
        %v1233 = vsel %vm1231, %v1200, %v457
        %v1234 = vsel %vm1231, %v1201, %v459
        %v1235 = vsel %vm1231, %v1202, %v461
        %v1236 = vsel %vm1231, %v1203, %v463
        %v1237 = vsel %vm1231, %v1204, %v465
        %v1238 = vsel %vm1231, %v1205, %v467
        %v1239 = vsel %vm1231, %v1206, %v469
        %v1240 = vsel %vm1231, %v1207, %v471
        %v1241 = vsel %vm1231, %v1208, %v473
        %v1242 = vsel %vm1231, %v1209, %v475
        %v1243 = vsel %vm1231, %v1210, %v477
        %v1244 = vsel %vm1231, %v1211, %v479
        %v1245 = vsel %vm1231, %v1212, %v481
        %v1246 = vsel %vm1231, %v1213, %v483
        %v1247 = vsel %vm1231, %v1214, %v485
        %v1248 = vsel %vm1231, %v1215, %v487
        %v1249 = vsel %vm1231, %v1216, %v489
        %v1250 = vsel %vm1231, %v1217, %v491
        %v1251 = vsel %vm1231, %v1218, %v493
        %v1252 = vsel %vm1231, %v1219, %v495
        %v1253 = vsel %vm1231, %v1220, %v497
        %v1254 = vsel %vm1231, %v1221, %v499
        %v1255 = vsel %vm1231, %v1222, %v501
        %v1256 = vsel %vm1231, %v1223, %v503
        %v1257 = vsel %vm1231, %v1224, %v505
        %v1258 = vsel %vm1231, %v1225, %v507
        %v1259 = vsel %vm1231, %v1226, %v509
        %v1260 = vsel %vm1231, %v1227, %v511
        %v1261 = vsel %vm1231, %v1228, %v513
        %v1262 = vsel %vm1231, %v1229, %v515
        %v1263 = vsel %vm1231, %v1230, %v517
        %vm1264 = vcmask 97280
        %v1265 = vsel %vm1264, %v1232, %v583
        %v1266 = vsel %vm1264, %v1233, %v585
        %v1267 = vsel %vm1264, %v1234, %v587
        %v1268 = vsel %vm1264, %v1235, %v589
        %v1269 = vsel %vm1264, %v1236, %v591
        %v1270 = vsel %vm1264, %v1237, %v593
        %v1271 = vsel %vm1264, %v1238, %v595
        %v1272 = vsel %vm1264, %v1239, %v597
        %v1273 = vsel %vm1264, %v1240, %v599
        %v1274 = vsel %vm1264, %v1241, %v601
        %v1275 = vsel %vm1264, %v1242, %v603
        %v1276 = vsel %vm1264, %v1243, %v605
        %v1277 = vsel %vm1264, %v1244, %v607
        %v1278 = vsel %vm1264, %v1245, %v609
        %v1279 = vsel %vm1264, %v1246, %v611
        %v1280 = vsel %vm1264, %v1247, %v613
        %v1281 = vsel %vm1264, %v1248, %v615
        %v1282 = vsel %vm1264, %v1249, %v617
        %v1283 = vsel %vm1264, %v1250, %v619
        %v1284 = vsel %vm1264, %v1251, %v621
        %v1285 = vsel %vm1264, %v1252, %v623
        %v1286 = vsel %vm1264, %v1253, %v625
        %v1287 = vsel %vm1264, %v1254, %v627
        %v1288 = vsel %vm1264, %v1255, %v629
        %v1289 = vsel %vm1264, %v1256, %v631
        %v1290 = vsel %vm1264, %v1257, %v633
        %v1291 = vsel %vm1264, %v1258, %v635
        %v1292 = vsel %vm1264, %v1259, %v637
        %v1293 = vsel %vm1264, %v1260, %v639
        %v1294 = vsel %vm1264, %v1261, %v641
        %v1295 = vsel %vm1264, %v1262, %v643
        %v1296 = vsel %vm1264, %v1263, %v645
        %vm1297 = vcmask 130048
        %v1298 = vsel %vm1297, %v1265, %v681
        %v1299 = vsel %vm1297, %v1266, %v683
        %v1300 = vsel %vm1297, %v1267, %v685
        %v1301 = vsel %vm1297, %v1268, %v687
        %v1302 = vsel %vm1297, %v1269, %v689
        %v1303 = vsel %vm1297, %v1270, %v691
        %v1304 = vsel %vm1297, %v1271, %v693
        %v1305 = vsel %vm1297, %v1272, %v695
        %v1306 = vsel %vm1297, %v1273, %v697
        %v1307 = vsel %vm1297, %v1274, %v699
        %v1308 = vsel %vm1297, %v1275, %v701
        %v1309 = vsel %vm1297, %v1276, %v703
        %v1310 = vsel %vm1297, %v1277, %v705
        %v1311 = vsel %vm1297, %v1278, %v707
        %v1312 = vsel %vm1297, %v1279, %v709
        %v1313 = vsel %vm1297, %v1280, %v711
        %v1314 = vsel %vm1297, %v1281, %v713
        %v1315 = vsel %vm1297, %v1282, %v715
        %v1316 = vsel %vm1297, %v1283, %v717
        %v1317 = vsel %vm1297, %v1284, %v719
        %v1318 = vsel %vm1297, %v1285, %v721
        %v1319 = vsel %vm1297, %v1286, %v723
        %v1320 = vsel %vm1297, %v1287, %v725
        %v1321 = vsel %vm1297, %v1288, %v727
        %v1322 = vsel %vm1297, %v1289, %v729
        %v1323 = vsel %vm1297, %v1290, %v731
        %v1324 = vsel %vm1297, %v1291, %v733
        %v1325 = vsel %vm1297, %v1292, %v735
        %v1326 = vsel %vm1297, %v1293, %v737
        %v1327 = vsel %vm1297, %v1294, %v739
        %v1328 = vsel %vm1297, %v1295, %v741
        %v1329 = vsel %vm1297, %v1296, %v743
        %vm1330 = vcmask 162816
        %v1331 = vsel %vm1330, %v1298, %v779
        %v1332 = vsel %vm1330, %v1299, %v781
        %v1333 = vsel %vm1330, %v1300, %v783
        %v1334 = vsel %vm1330, %v1301, %v785
        %v1335 = vsel %vm1330, %v1302, %v787
        %v1336 = vsel %vm1330, %v1303, %v789
        %v1337 = vsel %vm1330, %v1304, %v791
        %v1338 = vsel %vm1330, %v1305, %v793
        %v1339 = vsel %vm1330, %v1306, %v795
        %v1340 = vsel %vm1330, %v1307, %v797
        %v1341 = vsel %vm1330, %v1308, %v799
        %v1342 = vsel %vm1330, %v1309, %v801
        %v1343 = vsel %vm1330, %v1310, %v803
        %v1344 = vsel %vm1330, %v1311, %v805
        %v1345 = vsel %vm1330, %v1312, %v807
        %v1346 = vsel %vm1330, %v1313, %v809
        %v1347 = vsel %vm1330, %v1314, %v811
        %v1348 = vsel %vm1330, %v1315, %v813
        %v1349 = vsel %vm1330, %v1316, %v815
        %v1350 = vsel %vm1330, %v1317, %v817
        %v1351 = vsel %vm1330, %v1318, %v819
        %v1352 = vsel %vm1330, %v1319, %v821
        %v1353 = vsel %vm1330, %v1320, %v823
        %v1354 = vsel %vm1330, %v1321, %v825
        %v1355 = vsel %vm1330, %v1322, %v827
        %v1356 = vsel %vm1330, %v1323, %v829
        %v1357 = vsel %vm1330, %v1324, %v831
        %v1358 = vsel %vm1330, %v1325, %v833
        %v1359 = vsel %vm1330, %v1326, %v835
        %v1360 = vsel %vm1330, %v1327, %v837
        %v1361 = vsel %vm1330, %v1328, %v839
        %v1362 = vsel %vm1330, %v1329, %v841
        %vm1363 = vcmask 195584
        %v1364 = vsel %vm1363, %v1331, %v907
        %v1365 = vsel %vm1363, %v1332, %v909
        %v1366 = vsel %vm1363, %v1333, %v911
        %v1367 = vsel %vm1363, %v1334, %v913
        %v1368 = vsel %vm1363, %v1335, %v915
        %v1369 = vsel %vm1363, %v1336, %v917
        %v1370 = vsel %vm1363, %v1337, %v919
        %v1371 = vsel %vm1363, %v1338, %v921
        %v1372 = vsel %vm1363, %v1339, %v923
        %v1373 = vsel %vm1363, %v1340, %v925
        %v1374 = vsel %vm1363, %v1341, %v927
        %v1375 = vsel %vm1363, %v1342, %v929
        %v1376 = vsel %vm1363, %v1343, %v931
        %v1377 = vsel %vm1363, %v1344, %v933
        %v1378 = vsel %vm1363, %v1345, %v935
        %v1379 = vsel %vm1363, %v1346, %v937
        %v1380 = vsel %vm1363, %v1347, %v939
        %v1381 = vsel %vm1363, %v1348, %v941
        %v1382 = vsel %vm1363, %v1349, %v943
        %v1383 = vsel %vm1363, %v1350, %v945
        %v1384 = vsel %vm1363, %v1351, %v947
        %v1385 = vsel %vm1363, %v1352, %v949
        %v1386 = vsel %vm1363, %v1353, %v951
        %v1387 = vsel %vm1363, %v1354, %v953
        %v1388 = vsel %vm1363, %v1355, %v955
        %v1389 = vsel %vm1363, %v1356, %v957
        %v1390 = vsel %vm1363, %v1357, %v959
        %v1391 = vsel %vm1363, %v1358, %v961
        %v1392 = vsel %vm1363, %v1359, %v963
        %v1393 = vsel %vm1363, %v1360, %v965
        %v1394 = vsel %vm1363, %v1361, %v967
        %v1395 = vsel %vm1363, %v1362, %v969
        %vm1396 = vcmask 228352
        %v1397 = vsel %vm1396, %v1364, %v1005
        %v1398 = vsel %vm1396, %v1365, %v1007
        %v1399 = vsel %vm1396, %v1366, %v1009
        %v1400 = vsel %vm1396, %v1367, %v1011
        %v1401 = vsel %vm1396, %v1368, %v1013
        %v1402 = vsel %vm1396, %v1369, %v1015
        %v1403 = vsel %vm1396, %v1370, %v1017
        %v1404 = vsel %vm1396, %v1371, %v1019
        %v1405 = vsel %vm1396, %v1372, %v1021
        %v1406 = vsel %vm1396, %v1373, %v1023
        %v1407 = vsel %vm1396, %v1374, %v1025
        %v1408 = vsel %vm1396, %v1375, %v1027
        %v1409 = vsel %vm1396, %v1376, %v1029
        %v1410 = vsel %vm1396, %v1377, %v1031
        %v1411 = vsel %vm1396, %v1378, %v1033
        %v1412 = vsel %vm1396, %v1379, %v1035
        %v1413 = vsel %vm1396, %v1380, %v1037
        %v1414 = vsel %vm1396, %v1381, %v1039
        %v1415 = vsel %vm1396, %v1382, %v1041
        %v1416 = vsel %vm1396, %v1383, %v1043
        %v1417 = vsel %vm1396, %v1384, %v1045
        %v1418 = vsel %vm1396, %v1385, %v1047
        %v1419 = vsel %vm1396, %v1386, %v1049
        %v1420 = vsel %vm1396, %v1387, %v1051
        %v1421 = vsel %vm1396, %v1388, %v1053
        %v1422 = vsel %vm1396, %v1389, %v1055
        %v1423 = vsel %vm1396, %v1390, %v1057
        %v1424 = vsel %vm1396, %v1391, %v1059
        %v1425 = vsel %vm1396, %v1392, %v1061
        %v1426 = vsel %vm1396, %v1393, %v1063
        %v1427 = vsel %vm1396, %v1394, %v1065
        %v1428 = vsel %vm1396, %v1395, %v1067
        %vm1429 = vcmask 261120
        %v1430 = vsel %vm1429, %v1397, %v1103
        %v1431 = vsel %vm1429, %v1398, %v1105
        %v1432 = vsel %vm1429, %v1399, %v1107
        %v1433 = vsel %vm1429, %v1400, %v1109
        %v1434 = vsel %vm1429, %v1401, %v1111
        %v1435 = vsel %vm1429, %v1402, %v1113
        %v1436 = vsel %vm1429, %v1403, %v1115
        %v1437 = vsel %vm1429, %v1404, %v1117
        %v1438 = vsel %vm1429, %v1405, %v1119
        %v1439 = vsel %vm1429, %v1406, %v1121
        %v1440 = vsel %vm1429, %v1407, %v1123
        %v1441 = vsel %vm1429, %v1408, %v1125
        %v1442 = vsel %vm1429, %v1409, %v1127
        %v1443 = vsel %vm1429, %v1410, %v1129
        %v1444 = vsel %vm1429, %v1411, %v1131
        %v1445 = vsel %vm1429, %v1412, %v1133
        %v1446 = vsel %vm1429, %v1413, %v1135
        %v1447 = vsel %vm1429, %v1414, %v1137
        %v1448 = vsel %vm1429, %v1415, %v1139
        %v1449 = vsel %vm1429, %v1416, %v1141
        %v1450 = vsel %vm1429, %v1417, %v1143
        %v1451 = vsel %vm1429, %v1418, %v1145
        %v1452 = vsel %vm1429, %v1419, %v1147
        %v1453 = vsel %vm1429, %v1420, %v1149
        %v1454 = vsel %vm1429, %v1421, %v1151
        %v1455 = vsel %vm1429, %v1422, %v1153
        %v1456 = vsel %vm1429, %v1423, %v1155
        %v1457 = vsel %vm1429, %v1424, %v1157
        %v1458 = vsel %vm1429, %v1425, %v1159
        %v1459 = vsel %vm1429, %v1426, %v1161
        %v1460 = vsel %vm1429, %v1427, %v1163
        %v1461 = vsel %vm1429, %v1428, %v1165
        %v1462 = vld [vmem:[#allocation5] sm:$0xff]
        %v1463 = vld [vmem:[#allocation5 + $0x8] sm:$0xff]
        %v1464 = vld [vmem:[#allocation5 + $0x10] sm:$0xff]
        %v1465 = vld [vmem:[#allocation5 + $0x18] sm:$0xff]
        %v1466 = vld [vmem:[#allocation5 + $0x20] sm:$0xf]
        %v1467 = vld [vmem:[#allocation7] sm:$0x1]
        %v1469 = vlaneseq
        %v1470 = vshrl.u32 %v1469, 7
        %v1471 = vsub.s32 0, %v1470
        %v1472 = vrot.slane %v1467, %v1471
        %vm1474 = vcmask 293888
        %v1476 = vsel %vm1474, %v1430, 0
        %v1479 = vsel %vm1474, %v1431, 0
        %v1482 = vsel %vm1474, %v1432, 0
        %v1485 = vsel %vm1474, %v1433, 0
        %v1488 = vsel %vm1474, %v1434, 0
        %v1491 = vsel %vm1474, %v1435, 0
        %v1494 = vsel %vm1474, %v1436, 0
        %v1497 = vsel %vm1474, %v1437, 0
        %v1500 = vsel %vm1474, %v1438, 0
        %v1503 = vsel %vm1474, %v1439, 0
        %v1506 = vsel %vm1474, %v1440, 0
        %v1509 = vsel %vm1474, %v1441, 0
        %v1512 = vsel %vm1474, %v1442, 0
        %v1515 = vsel %vm1474, %v1443, 0
        %v1518 = vsel %vm1474, %v1444, 0
        %v1521 = vsel %vm1474, %v1445, 0
        %v1524 = vsel %vm1474, %v1446, 0
        %v1527 = vsel %vm1474, %v1447, 0
        %v1530 = vsel %vm1474, %v1448, 0
        %v1533 = vsel %vm1474, %v1449, 0
        %v1536 = vsel %vm1474, %v1450, 0
        %v1539 = vsel %vm1474, %v1451, 0
        %v1542 = vsel %vm1474, %v1452, 0
        %v1545 = vsel %vm1474, %v1453, 0
        %v1548 = vsel %vm1474, %v1454, 0
        %v1551 = vsel %vm1474, %v1455, 0
        %v1554 = vsel %vm1474, %v1456, 0
        %v1557 = vsel %vm1474, %v1457, 0
        %v1560 = vsel %vm1474, %v1458, 0
        %v1563 = vsel %vm1474, %v1459, 0
        %v1566 = vsel %vm1474, %v1460, 0
        %v1569 = vsel %vm1474, %v1461, 0
        %vm1571 = vcmask 1043456
        %v1573 = vsel %vm1571, %v1466, 0
        %1575 = vmatprep.subr.mxu0 0.0
        %1576 = vmatpush1.msra.mxu0 %v1462
        %1577 = vmatprep.subr.mxu0 0.0
        %1578 = vmatpush1.msra.mxu0 %v1463
        %1579 = vmatprep.subr.mxu0 0.0
        %1580 = vmatpush1.msra.mxu0 %v1464
        %1581 = vmatprep.subr.mxu0 0.0
        %1582 = vmatpush1.msra.mxu0 %v1465
        %1583 = vmatprep.subr.mxu0 0.0
        %1584 = vmatpush1.msra.mxu0 %v1573
        %1585 = vmatprep.subr.mxu0 0.0
        %1586 = vmatpush1.msra.mxu0 0.0
        %1587 = vmatprep.subr.mxu0 0.0
        %1588 = vmatpush1.msra.mxu0 0.0
        %1589 = vmatprep.subr.mxu0 0.0
        %1590 = vmatpush1.msra.mxu0 0.0
        %1591 = vmatprep.subr.mxu0 0.0
        %1592 = vmatpush1.msra.mxu0 0.0
        %1593 = vmatprep.subr.mxu0 0.0
        %1594 = vmatpush1.msra.mxu0 0.0
        %1595 = vmatprep.subr.mxu0 0.0
        %1596 = vmatpush1.msra.mxu0 0.0
        %1597 = vmatprep.subr.mxu0 0.0
        %1598 = vmatpush1.msra.mxu0 0.0
        %1599 = vmatprep.subr.mxu0 0.0
        %1600 = vmatpush1.msra.mxu0 0.0
        %1601 = vmatprep.subr.mxu0 0.0
        %1602 = vmatpush1.msra.mxu0 0.0
        %1603 = vmatprep.subr.mxu0 0.0
        %1604 = vmatpush1.msra.mxu0 0.0
        %1605 = vmatprep.subr.mxu0 0.0
        %1606 = vmatpush1.msra.mxu0 0.0
        %1607 = vmatprep.subr.mxu0 0.0
        %1608 = vmatpush1.msra.mxu0 0.0
        %1609 = vmatprep.subr.mxu0 0.0
        %1610 = vmatpush1.msra.mxu0 0.0
        %1611 = vmatprep.subr.mxu0 0.0
        %1612 = vmatpush1.msra.mxu0 0.0
        %1613 = vmatprep.subr.mxu0 0.0
        %1614 = vmatpush1.msra.mxu0 0.0
        %1615 = vmatprep.subr.mxu0 0.0
        %1616 = vmatpush1.msra.mxu0 0.0
        %1617 = vmatprep.subr.mxu0 0.0
        %1618 = vmatpush1.msra.mxu0 0.0
        %1619 = vmatprep.subr.mxu0 0.0
        %1620 = vmatpush1.msra.mxu0 0.0
        %1621 = vmatprep.subr.mxu0 0.0
        %1622 = vmatpush1.msra.mxu0 0.0
        %1623 = vmatprep.subr.mxu0 0.0
        %1624 = vmatpush1.msra.mxu0 0.0
        %1625 = vmatprep.subr.mxu0 0.0
        %1626 = vmatpush1.msra.mxu0 0.0
        %1627 = vmatprep.subr.mxu0 0.0
        %1628 = vmatpush1.msra.mxu0 0.0
        %1629 = vmatprep.subr.mxu0 0.0
        %1630 = vmatpush1.msra.mxu0 0.0
        %1631 = vmatprep.subr.mxu0 0.0
        %1632 = vmatpush1.msra.mxu0 0.0
        %1633 = vmatprep.subr.mxu0 0.0
        %1634 = vmatpush1.msra.mxu0 0.0
        %1635 = vmatprep.subr.mxu0 0.0
        %1636 = vmatpush1.msra.mxu0 0.0
        %1637 = vmatprep.subr.mxu0 0.0
        %1638 = vmatpush1.msra.mxu0 0.0
        %1639 = vmatprep.mubr.f32.mxu0 0.0
        %1640 = vmatmul.mubr.f32.gmra.mrb[0].mxu0 %v1476
        %v1641 = vpop.f32.mrb[0].mxu0
        %v1642 = vadd.f32 %v1472, %v1641
        %v1643 = vpop.f32.mrb[0].mxu0
        %1644 = vmatprep.mubr.f32.mxu0 0.0
        %1645 = vmatmul.mubr.f32.gmra.mrb[0].mxu0 %v1479
        %v1646 = vpop.f32.mrb[0].mxu0
        %v1647 = vadd.f32 %v1472, %v1646
        %v1648 = vpop.f32.mrb[0].mxu0
        %1649 = vmatprep.mubr.f32.mxu0 0.0
        %1650 = vmatmul.mubr.f32.gmra.mrb[0].mxu0 %v1482
        %v1651 = vpop.f32.mrb[0].mxu0
        %v1652 = vadd.f32 %v1472, %v1651
        %v1653 = vpop.f32.mrb[0].mxu0
        %1654 = vmatprep.mubr.f32.mxu0 0.0
        %1655 = vmatmul.mubr.f32.gmra.mrb[0].mxu0 %v1485
        %v1656 = vpop.f32.mrb[0].mxu0
        %v1657 = vadd.f32 %v1472, %v1656
        %v1658 = vpop.f32.mrb[0].mxu0
        %1659 = vmatprep.mubr.f32.mxu0 0.0
        %1660 = vmatmul.mubr.f32.gmra.mrb[0].mxu0 %v1488
        %v1661 = vpop.f32.mrb[0].mxu0
        %v1662 = vadd.f32 %v1472, %v1661
        %v1663 = vpop.f32.mrb[0].mxu0
        %1664 = vmatprep.mubr.f32.mxu0 0.0
        %1665 = vmatmul.mubr.f32.gmra.mrb[0].mxu0 %v1491
        %v1666 = vpop.f32.mrb[0].mxu0
        %v1667 = vadd.f32 %v1472, %v1666
        %v1668 = vpop.f32.mrb[0].mxu0
        %1669 = vmatprep.mubr.f32.mxu0 0.0
        %1670 = vmatmul.mubr.f32.gmra.mrb[0].mxu0 %v1494
        %v1671 = vpop.f32.mrb[0].mxu0
        %v1672 = vadd.f32 %v1472, %v1671
        %v1673 = vpop.f32.mrb[0].mxu0
        %1674 = vmatprep.mubr.f32.mxu0 0.0
        %1675 = vmatmul.mubr.f32.gmra.mrb[0].mxu0 %v1497
        %v1676 = vpop.f32.mrb[0].mxu0
        %v1677 = vadd.f32 %v1472, %v1676
        %v1678 = vpop.f32.mrb[0].mxu0
        %1679 = vmatprep.mubr.f32.mxu0 0.0
        %1680 = vmatmul.mubr.f32.gmra.mrb[0].mxu0 %v1500
        %v1681 = vpop.f32.mrb[0].mxu0
        %v1682 = vadd.f32 %v1472, %v1681
        %v1683 = vpop.f32.mrb[0].mxu0
        %1684 = vmatprep.mubr.f32.mxu0 0.0
        %1685 = vmatmul.mubr.f32.gmra.mrb[0].mxu0 %v1503
        %v1686 = vpop.f32.mrb[0].mxu0
        %v1687 = vadd.f32 %v1472, %v1686
        %v1688 = vpop.f32.mrb[0].mxu0
        %1689 = vmatprep.mubr.f32.mxu0 0.0
        %1690 = vmatmul.mubr.f32.gmra.mrb[0].mxu0 %v1506
        %v1691 = vpop.f32.mrb[0].mxu0
        %v1692 = vadd.f32 %v1472, %v1691
        %v1693 = vpop.f32.mrb[0].mxu0
        %1694 = vmatprep.mubr.f32.mxu0 0.0
        %1695 = vmatmul.mubr.f32.gmra.mrb[0].mxu0 %v1509
        %v1696 = vpop.f32.mrb[0].mxu0
        %v1697 = vadd.f32 %v1472, %v1696
        %v1698 = vpop.f32.mrb[0].mxu0
        %1699 = vmatprep.mubr.f32.mxu0 0.0
        %1700 = vmatmul.mubr.f32.gmra.mrb[0].mxu0 %v1512
        %v1701 = vpop.f32.mrb[0].mxu0
        %v1702 = vadd.f32 %v1472, %v1701
        %v1703 = vpop.f32.mrb[0].mxu0
        %1704 = vmatprep.mubr.f32.mxu0 0.0
        %1705 = vmatmul.mubr.f32.gmra.mrb[0].mxu0 %v1515
        %v1706 = vpop.f32.mrb[0].mxu0
        %v1707 = vadd.f32 %v1472, %v1706
        %v1708 = vpop.f32.mrb[0].mxu0
        %1709 = vmatprep.mubr.f32.mxu0 0.0
        %1710 = vmatmul.mubr.f32.gmra.mrb[0].mxu0 %v1518
        %v1711 = vpop.f32.mrb[0].mxu0
        %v1712 = vadd.f32 %v1472, %v1711
        %v1713 = vpop.f32.mrb[0].mxu0
        %1714 = vmatprep.mubr.f32.mxu0 0.0
        %1715 = vmatmul.mubr.f32.gmra.mrb[0].mxu0 %v1521
        %v1716 = vpop.f32.mrb[0].mxu0
        %v1717 = vadd.f32 %v1472, %v1716
        %v1718 = vpop.f32.mrb[0].mxu0
        %1719 = vmatprep.mubr.f32.mxu0 0.0
        %1720 = vmatmul.mubr.f32.gmra.mrb[0].mxu0 %v1524
        %v1721 = vpop.f32.mrb[0].mxu0
        %v1722 = vadd.f32 %v1472, %v1721
        %v1723 = vpop.f32.mrb[0].mxu0
        %1724 = vmatprep.mubr.f32.mxu0 0.0
        %1725 = vmatmul.mubr.f32.gmra.mrb[0].mxu0 %v1527
        %v1726 = vpop.f32.mrb[0].mxu0
        %v1727 = vadd.f32 %v1472, %v1726
        %v1728 = vpop.f32.mrb[0].mxu0
        %1729 = vmatprep.mubr.f32.mxu0 0.0
        %1730 = vmatmul.mubr.f32.gmra.mrb[0].mxu0 %v1530
        %v1731 = vpop.f32.mrb[0].mxu0
        %v1732 = vadd.f32 %v1472, %v1731
        %v1733 = vpop.f32.mrb[0].mxu0
        %1734 = vmatprep.mubr.f32.mxu0 0.0
        %1735 = vmatmul.mubr.f32.gmra.mrb[0].mxu0 %v1533
        %v1736 = vpop.f32.mrb[0].mxu0
        %v1737 = vadd.f32 %v1472, %v1736
        %v1738 = vpop.f32.mrb[0].mxu0
        %1739 = vmatprep.mubr.f32.mxu0 0.0
        %1740 = vmatmul.mubr.f32.gmra.mrb[0].mxu0 %v1536
        %v1741 = vpop.f32.mrb[0].mxu0
        %v1742 = vadd.f32 %v1472, %v1741
        %v1743 = vpop.f32.mrb[0].mxu0
        %1744 = vmatprep.mubr.f32.mxu0 0.0
        %1745 = vmatmul.mubr.f32.gmra.mrb[0].mxu0 %v1539
        %v1746 = vpop.f32.mrb[0].mxu0
        %v1747 = vadd.f32 %v1472, %v1746
        %v1748 = vpop.f32.mrb[0].mxu0
        %1749 = vmatprep.mubr.f32.mxu0 0.0
        %1750 = vmatmul.mubr.f32.gmra.mrb[0].mxu0 %v1542
        %v1751 = vpop.f32.mrb[0].mxu0
        %v1752 = vadd.f32 %v1472, %v1751
        %v1753 = vpop.f32.mrb[0].mxu0
        %1754 = vmatprep.mubr.f32.mxu0 0.0
        %1755 = vmatmul.mubr.f32.gmra.mrb[0].mxu0 %v1545
        %v1756 = vpop.f32.mrb[0].mxu0
        %v1757 = vadd.f32 %v1472, %v1756
        %v1758 = vpop.f32.mrb[0].mxu0
        %1759 = vmatprep.mubr.f32.mxu0 0.0
        %1760 = vmatmul.mubr.f32.gmra.mrb[0].mxu0 %v1548
        %v1761 = vpop.f32.mrb[0].mxu0
        %v1762 = vadd.f32 %v1472, %v1761
        %v1763 = vpop.f32.mrb[0].mxu0
        %1764 = vmatprep.mubr.f32.mxu0 0.0
        %1765 = vmatmul.mubr.f32.gmra.mrb[0].mxu0 %v1551
        %v1766 = vpop.f32.mrb[0].mxu0
        %v1767 = vadd.f32 %v1472, %v1766
        %v1768 = vpop.f32.mrb[0].mxu0
        %1769 = vmatprep.mubr.f32.mxu0 0.0
        %1770 = vmatmul.mubr.f32.gmra.mrb[0].mxu0 %v1554
        %v1771 = vpop.f32.mrb[0].mxu0
        %v1772 = vadd.f32 %v1472, %v1771
        %v1773 = vpop.f32.mrb[0].mxu0
        %1774 = vmatprep.mubr.f32.mxu0 0.0
        %1775 = vmatmul.mubr.f32.gmra.mrb[0].mxu0 %v1557
        %v1776 = vpop.f32.mrb[0].mxu0
        %v1777 = vadd.f32 %v1472, %v1776
        %v1778 = vpop.f32.mrb[0].mxu0
        %1779 = vmatprep.mubr.f32.mxu0 0.0
        %1780 = vmatmul.mubr.f32.gmra.mrb[0].mxu0 %v1560
        %v1781 = vpop.f32.mrb[0].mxu0
        %v1782 = vadd.f32 %v1472, %v1781
        %v1783 = vpop.f32.mrb[0].mxu0
        %1784 = vmatprep.mubr.f32.mxu0 0.0
        %1785 = vmatmul.mubr.f32.gmra.mrb[0].mxu0 %v1563
        %v1786 = vpop.f32.mrb[0].mxu0
        %v1787 = vadd.f32 %v1472, %v1786
        %v1788 = vpop.f32.mrb[0].mxu0
        %1789 = vmatprep.mubr.f32.mxu0 0.0
        %1790 = vmatmul.mubr.f32.gmra.mrb[0].mxu0 %v1566
        %v1791 = vpop.f32.mrb[0].mxu0
        %v1792 = vadd.f32 %v1472, %v1791
        %v1793 = vpop.f32.mrb[0].mxu0
        %1794 = vmatprep.mubr.f32.mxu0 0.0
        %1795 = vmatmul.mubr.f32.gmra.mrb[0].mxu0 %v1569
        %v1796 = vpop.f32.mrb[0].mxu0
        %v1797 = vadd.f32 %v1472, %v1796
        %v1798 = vpop.f32.mrb[0].mxu0
        %1799 = vdwg.mxu0
        %vm1800 = vcmp.ge.f32.partialorder %v1642, 0.0
        %vm1801 = vcmp.ge.f32.partialorder %v1647, 0.0
        %vm1802 = vcmp.ge.f32.partialorder %v1652, 0.0
        %vm1803 = vcmp.ge.f32.partialorder %v1657, 0.0
        %vm1804 = vcmp.ge.f32.partialorder %v1662, 0.0
        %vm1805 = vcmp.ge.f32.partialorder %v1667, 0.0
        %vm1806 = vcmp.ge.f32.partialorder %v1672, 0.0
        %vm1807 = vcmp.ge.f32.partialorder %v1677, 0.0
        %vm1808 = vcmp.ge.f32.partialorder %v1682, 0.0
        %vm1809 = vcmp.ge.f32.partialorder %v1687, 0.0
        %vm1810 = vcmp.ge.f32.partialorder %v1692, 0.0
        %vm1811 = vcmp.ge.f32.partialorder %v1697, 0.0
        %vm1812 = vcmp.ge.f32.partialorder %v1702, 0.0
        %vm1813 = vcmp.ge.f32.partialorder %v1707, 0.0
        %vm1814 = vcmp.ge.f32.partialorder %v1712, 0.0
        %vm1815 = vcmp.ge.f32.partialorder %v1717, 0.0
        %vm1816 = vcmp.ge.f32.partialorder %v1722, 0.0
        %vm1817 = vcmp.ge.f32.partialorder %v1727, 0.0
        %vm1818 = vcmp.ge.f32.partialorder %v1732, 0.0
        %vm1819 = vcmp.ge.f32.partialorder %v1737, 0.0
        %vm1820 = vcmp.ge.f32.partialorder %v1742, 0.0
        %vm1821 = vcmp.ge.f32.partialorder %v1747, 0.0
        %vm1822 = vcmp.ge.f32.partialorder %v1752, 0.0
        %vm1823 = vcmp.ge.f32.partialorder %v1757, 0.0
        %vm1824 = vcmp.ge.f32.partialorder %v1762, 0.0
        %vm1825 = vcmp.ge.f32.partialorder %v1767, 0.0
        %vm1826 = vcmp.ge.f32.partialorder %v1772, 0.0
        %vm1827 = vcmp.ge.f32.partialorder %v1777, 0.0
        %vm1828 = vcmp.ge.f32.partialorder %v1782, 0.0
        %vm1829 = vcmp.ge.f32.partialorder %v1787, 0.0
        %vm1830 = vcmp.ge.f32.partialorder %v1792, 0.0
        %vm1831 = vcmp.ge.f32.partialorder %v1797, 0.0
        %v1832 = vmul.f32 %v1642, 0.2
        %v1833 = vmul.f32 %v1647, 0.2
        %v1834 = vmul.f32 %v1652, 0.2
        %v1835 = vmul.f32 %v1657, 0.2
        %v1836 = vmul.f32 %v1662, 0.2
        %v1837 = vmul.f32 %v1667, 0.2
        %v1838 = vmul.f32 %v1672, 0.2
        %v1839 = vmul.f32 %v1677, 0.2
        %v1840 = vmul.f32 %v1682, 0.2
        %v1841 = vmul.f32 %v1687, 0.2
        %v1842 = vmul.f32 %v1692, 0.2
        %v1843 = vmul.f32 %v1697, 0.2
        %v1844 = vmul.f32 %v1702, 0.2
        %v1845 = vmul.f32 %v1707, 0.2
        %v1846 = vmul.f32 %v1712, 0.2
        %v1847 = vmul.f32 %v1717, 0.2
        %v1848 = vmul.f32 %v1722, 0.2
        %v1849 = vmul.f32 %v1727, 0.2
        %v1850 = vmul.f32 %v1732, 0.2
        %v1851 = vmul.f32 %v1737, 0.2
        %v1852 = vmul.f32 %v1742, 0.2
        %v1853 = vmul.f32 %v1747, 0.2
        %v1854 = vmul.f32 %v1752, 0.2
        %v1855 = vmul.f32 %v1757, 0.2
        %v1856 = vmul.f32 %v1762, 0.2
        %v1857 = vmul.f32 %v1767, 0.2
        %v1858 = vmul.f32 %v1772, 0.2
        %v1859 = vmul.f32 %v1777, 0.2
        %v1860 = vmul.f32 %v1782, 0.2
        %v1861 = vmul.f32 %v1787, 0.2
        %v1862 = vmul.f32 %v1792, 0.2
        %v1863 = vmul.f32 %v1797, 0.2
        %v1864 = vsel %vm1800, %v1642, %v1832
        %v1865 = vsel %vm1801, %v1647, %v1833
        %v1866 = vsel %vm1802, %v1652, %v1834
        %v1867 = vsel %vm1803, %v1657, %v1835
        %v1868 = vsel %vm1804, %v1662, %v1836
        %v1869 = vsel %vm1805, %v1667, %v1837
        %v1870 = vsel %vm1806, %v1672, %v1838
        %v1871 = vsel %vm1807, %v1677, %v1839
        %v1872 = vsel %vm1808, %v1682, %v1840
        %v1873 = vsel %vm1809, %v1687, %v1841
        %v1874 = vsel %vm1810, %v1692, %v1842
        %v1875 = vsel %vm1811, %v1697, %v1843
        %v1876 = vsel %vm1812, %v1702, %v1844
        %v1877 = vsel %vm1813, %v1707, %v1845
        %v1878 = vsel %vm1814, %v1712, %v1846
        %v1879 = vsel %vm1815, %v1717, %v1847
        %v1880 = vsel %vm1816, %v1722, %v1848
        %v1881 = vsel %vm1817, %v1727, %v1849
        %v1882 = vsel %vm1818, %v1732, %v1850
        %v1883 = vsel %vm1819, %v1737, %v1851
        %v1884 = vsel %vm1820, %v1742, %v1852
        %v1885 = vsel %vm1821, %v1747, %v1853
        %v1886 = vsel %vm1822, %v1752, %v1854
        %v1887 = vsel %vm1823, %v1757, %v1855
        %v1888 = vsel %vm1824, %v1762, %v1856
        %v1889 = vsel %vm1825, %v1767, %v1857
        %v1890 = vsel %vm1826, %v1772, %v1858
        %v1891 = vsel %vm1827, %v1777, %v1859
        %v1892 = vsel %vm1828, %v1782, %v1860
        %v1893 = vsel %vm1829, %v1787, %v1861
        %v1894 = vsel %vm1830, %v1792, %v1862
        %v1895 = vsel %vm1831, %v1797, %v1863
        %1896 = vst [vmem:[%s215] sm:$0xff] %v1864
        %1897 = vst [vmem:[%s215 + $0x8] sm:$0xff] %v1865
        %1898 = vst [vmem:[%s215 + $0x10] sm:$0xff] %v1866
        %1899 = vst [vmem:[%s215 + $0x18] sm:$0xff] %v1867
        %1900 = vst [vmem:[%s215 + $0x20] sm:$0xff] %v1868
        %1901 = vst [vmem:[%s215 + $0x28] sm:$0xff] %v1869
        %1902 = vst [vmem:[%s215 + $0x30] sm:$0xff] %v1870
        %1903 = vst [vmem:[%s215 + $0x38] sm:$0xff] %v1871
        %1904 = vst [vmem:[%s215 + $0x40] sm:$0xff] %v1872
        %1905 = vst [vmem:[%s215 + $0x48] sm:$0xff] %v1873
        %1906 = vst [vmem:[%s215 + $0x50] sm:$0xff] %v1874
        %1907 = vst [vmem:[%s215 + $0x58] sm:$0xff] %v1875
        %1908 = vst [vmem:[%s215 + $0x60] sm:$0xff] %v1876
        %1909 = vst [vmem:[%s215 + $0x68] sm:$0xff] %v1877
        %1910 = vst [vmem:[%s215 + $0x70] sm:$0xff] %v1878
        %1911 = vst [vmem:[%s215 + $0x78] sm:$0xff] %v1879
        %1912 = vst [vmem:[%s215 + $0x80] sm:$0xff] %v1880
        %1913 = vst [vmem:[%s215 + $0x88] sm:$0xff] %v1881
        %1914 = vst [vmem:[%s215 + $0x90] sm:$0xff] %v1882
        %1915 = vst [vmem:[%s215 + $0x98] sm:$0xff] %v1883
        %1916 = vst [vmem:[%s215 + $0xa0] sm:$0xff] %v1884
        %1917 = vst [vmem:[%s215 + $0xa8] sm:$0xff] %v1885
        %1918 = vst [vmem:[%s215 + $0xb0] sm:$0xff] %v1886
        %1919 = vst [vmem:[%s215 + $0xb8] sm:$0xff] %v1887
        %1920 = vst [vmem:[%s215 + $0xc0] sm:$0xff] %v1888
        %1921 = vst [vmem:[%s215 + $0xc8] sm:$0xff] %v1889
        %1922 = vst [vmem:[%s215 + $0xd0] sm:$0xff] %v1890
        %1923 = vst [vmem:[%s215 + $0xd8] sm:$0xff] %v1891
        %1924 = vst [vmem:[%s215 + $0xe0] sm:$0xff] %v1892
        %1925 = vst [vmem:[%s215 + $0xe8] sm:$0xff] %v1893
        %1926 = vst [vmem:[%s215 + $0xf0] sm:$0xff] %v1894
        %1927 = vst [vmem:[%s215 + $0xf8] sm:$0xff] %v1895
        %s1928 = sand.u32 %s97, 1
        %s1929 = scalar_lea.sflag [#allocation4], %s1928
        %s1930 = sand.u32 %s97, 1
        %s1931 = smul.addr %s1930, 256
        %s1932 = scalar_lea.vmem [#allocation8], %s1931
        // Predicated region
        $region45: #{tpu_custom_call.1} parent=31 // pred_check
          %p1933 = pneg %p107
        $region46: #{tpu_custom_call.1} parent=31 // pred_check_branch
          %1935 = sbr.rel (%p1933) target = $region48
        $region47: #{tpu_custom_call.1} parent=31 // pred_region
          %s1937 = ssub.s32 4096, 4096
          %1938 = vsyncadd %s1929, %s1937
          %s1939 = smul.addr %s21, 32
          %s1940 = smul.addr %s1939, 128
          %s1941 = scalar_lea.hbm %s3, %s1940
          %s1942 = sshll.u32 %s1932, 4
          %s1943 = int_to_ptr.vmem [resolvable:$true] %s1942
          %1948 = dma.vmem_to_hbm [thread:$0]  %s1943, 4096, %s1941, %s1929, 128, 128, 8
        $region48: #{tpu_custom_call.1} parent=31 // pred_fallthru
          _
      $region32: #{tpu_custom_call.1} parent=5 // pred_fallthru
        _
      %p1949 = scmp.le.s32.totalorder 2, %s16
      // Predicated region
      $region49: #{tpu_custom_call.1} parent=5 // pred_check
        %p1950 = pneg %p1949
      $region50: #{tpu_custom_call.1} parent=5 // pred_check_branch
        %1952 = sbr.rel (%p1950) target = $region52
      $region51: #{tpu_custom_call.1} parent=5 // pred_region
        %s1953 = ssub.s32 %s16, 2
        // Predicated region
        $region53: #{tpu_custom_call.1} parent=51 // pred_check
          %p1954 = pneg %p113
        $region54: #{tpu_custom_call.1} parent=51 // pred_check_branch
          %1956 = sbr.rel (%p1954) target = $region56
        $region55: #{tpu_custom_call.1} parent=51 // pred_region
          %s1957 = sand.u32 %s98, 1
          %s1958 = scalar_lea.sflag [#allocation4], %s1957
          %s1959 = sand.u32 %s98, 1
          %s1960 = smul.addr %s1959, 256
          %s1961 = scalar_lea.vmem [#allocation8], %s1960
          %1962 = dma.done %s1958, 4096
        $region56: #{tpu_custom_call.1} parent=51 // pred_fallthru
          _
      $region52: #{tpu_custom_call.1} parent=5 // pred_fallthru
        _
    $region6: #{tpu_custom_call.1} parent=1 // loop_footer
      %s20 = sadd.s32 1, %s16
    $region7: #{tpu_custom_call.1} parent=1 // loop_footer_branch
      %15 = sbr.rel target = $region3
    $region8: #{tpu_custom_call.1} parent=1 // loop_exit
      _
    %1963 = vsyncpa [#allocation3], 1
    %s1964 = scalar_lea.sflag [#allocation3], 1
    %1965 = vsyncpa %s1964, 1
    %1966 = vsyncpa [#allocation6], 1
    %1967 = vsyncpa [#allocation4], 1
    %s1968 = scalar_lea.sflag [#allocation4], 1
    %1969 = vsyncpa %s1968, 1

</llo_original>
